<compile_context>
chip_gen: v6e
topology: v6e:2x2x1
jax: 0.10.0
libtpu: 0.0.40
codegen_flags: <defaults>
</compile_context>

<pallas_src>
import jax
import jax.numpy as jnp
from jax import lax
from jax.experimental import pallas as pl
from jax.experimental.pallas import tpu as pltpu

EPS = 1e-5


# ----------------------------- hw / sizing helpers --------------------------


def _round_up(n, m):
    return ((n + m - 1) // m) * m


def _sublane(dtype):
    # Minimum sublane granularity per dtype packing: 8 (f32), 16 (bf16), 32 (i8).
    return 32 // jnp.dtype(dtype).itemsize


def _tpu_info():
    try:
        return pltpu.get_tpu_info()
    except Exception:
        return None


def _vmem_capacity_bytes():
    info = _tpu_info()
    cap = getattr(info, "vmem_capacity_bytes", None) if info is not None else None
    try:
        cap = int(cap) if cap else None
    except (TypeError, ValueError):
        cap = None
    # Conservative fallback: v7x per-TensorCore VMEM.
    return cap if cap else (64 << 20)


def _num_tensorcores():
    info = _tpu_info()
    if info is not None:
        for attr in ("num_cores", "core_count", "tensorcore_count"):
            v = getattr(info, attr, None)
            if v:
                try:
                    return max(1, int(v))
                except (TypeError, ValueError):
                    pass
    try:
        kind = jax.devices()[0].device_kind.lower()
    except Exception:
        return 1
    # 2 TensorCores per chip on v7x / megacore parts; 1 on v5e / v6e.
    return 2 if any(t in kind for t in ("v7", "v5p", "v4")) else 1


def _pick_tile_m(m, requested, dtype):
    """Row tile: sublane-aligned; no halving on 1-TC chips; >=2 tiles per core
    on multi-TC chips; 128-row quantum for large m (lane/MXU-friendly DMAs)."""
    sub = _sublane(dtype)
    if m <= requested:
        return _round_up(m, sub)          # one (or few) grid steps cover it all
    quantum = 128 if m >= 128 else sub
    ncores = _num_tensorcores()
    tile = requested
    if ncores > 1:
        # >= 2 tiles per TensorCore so each core's BlockSpec double-buffering
        # has something to pipeline.
        tile = min(tile, pl.cdiv(m, 2 * ncores))
    tile = _round_up(max(tile, sub), quantum)
    return min(tile, _round_up(m, sub))


def _vmem_limit_bytes(tile_m, d_in, tile_n, itemsize, w_itemsize, w_buffers):
    """Generation-aware VMEM budget: sized from the actually-resident tiles,
    clamped to physical VMEM minus headroom for compiler-internal scratch."""
    cap = max(_vmem_capacity_bytes() - (8 << 20), 16 << 20)
    need = 2 * tile_m * d_in * itemsize                 # double-buffered x tiles
    need += 2 * tile_m * tile_n * itemsize              # double-buffered out tiles
    need += w_buffers * d_in * tile_n * w_itemsize      # resident weight slab(s)
    need += 4 * 2 * (2 * d_in + tile_n)                 # gamma/beta/bias
    need += 4 * tile_m * max(d_in, tile_n) * 4          # in-kernel f32 temporaries
    return int(min(max(2 * need, 16 << 20), cap))


def _call_with_single_buffer_fallback(build, args):
    """Invariant operands are requested single-buffered (pl.Buffered(1));
    fall back to default double-buffering if this Pallas build rejects it."""
    try:
        return build(True)(*args)
    except Exception:
        return build(False)(*args)


# ----------------------------- kernel math ----------------------------------


def _layernorm_rows(x, g, b):
    """LayerNorm of a (TM, D) f32 tile: shifted two-pass variance (numerically
    safe), biased variance, eps=1e-5, rsqrt on the EUP."""
    inv_d = jnp.float32(1.0 / x.shape[-1])
    mean = jnp.sum(x, axis=-1, keepdims=True) * inv_d
    xc = x - mean
    var = jnp.sum(xc * xc, axis=-1, keepdims=True) * inv_d
    return xc * lax.rsqrt(var + EPS) * g + b


def _prenorm_linear_kernel(x_ref, g_ref, b_ref, w_ref, bias_ref, o_ref):
    # x_ref: (TM, D_in); g/b: (1, D_in); w: (D_in, TN); bias: (1, TN).
    x = x_ref[...].astype(jnp.float32)
    y = _layernorm_rows(x,
                        g_ref[...].astype(jnp.float32),
                        b_ref[...].astype(jnp.float32))
    # Feed the MXU in the weight's (narrow) dtype; accumulate in f32.
    acc = jnp.dot(y.astype(w_ref.dtype), w_ref[...],
                  preferred_element_type=jnp.float32)
    o_ref[...] = (acc + bias_ref[...].astype(jnp.float32)).astype(o_ref.dtype)


def _layernorm_kernel(x_ref, g_ref, b_ref, o_ref):
    x = x_ref[...].astype(jnp.float32)
    o_ref[...] = _layernorm_rows(x,
                                 g_ref[...].astype(jnp.float32),
                                 b_ref[...].astype(jnp.float32)).astype(o_ref.dtype)


# ----------------------------- wrappers --------------------------------------


def prenorm_linear_pallas(x, gamma, beta, w, bias, *, tile_m=None, tile_n=512,
                          mxu_dtype=jnp.bfloat16):
    """Fused PreNorm(dim, Linear(dim, d_out)): LayerNorm(x) @ w + bias."""
    orig_shape = x.shape
    d_in = orig_shape[-1]
    d_out = w.shape[1]
    x2 = x.reshape(-1, d_in)
    m = x2.shape[0]
    itemsize = jnp.dtype(x.dtype).itemsize
    w_itemsize = jnp.dtype(mxu_dtype).itemsize

    # Keep live f32 tiles (x, centered x, y, acc) near the 64-vreg file.
    if tile_m is None:
        tile_m = {4: 128, 2: 256, 1: 512}.get(itemsize, 128)
    tm = _pick_tile_m(m, tile_m, x.dtype)
    m_pad = _round_up(m, tm)
    if m_pad != m:
        # Zero rows normalize to beta and produce finite garbage we slice off.
        x2 = jnp.pad(x2, ((0, m_pad - m), (0, 0)))

    # Lane-dense output: pad d_out to a multiple of 128; tile it for big dims.
    d_out_pad = _round_up(d_out, 128)
    w_p = w.astype(mxu_dtype)
    bias_p = bias.reshape(1, d_out)
    if d_out_pad != d_out:
        w_p = jnp.pad(w_p, ((0, 0), (0, d_out_pad - d_out)))
        bias_p = jnp.pad(bias_p, ((0, 0), (0, d_out_pad - d_out)))
    tn = min(tile_n, d_out_pad)
    while d_out_pad % tn:          # tn stays a multiple of 128 and divides d_out_pad
        tn -= 128

    g2 = gamma.reshape(1, d_in)
    b2 = beta.reshape(1, d_in)
    w_tiled = d_out_pad != tn      # weight varies along the j axis -> keep 2 buffers

    cost = pl.CostEstimate(
        flops=2 * m_pad * d_in * d_out_pad + 10 * m_pad * d_in,
        transcendentals=m_pad,
        bytes_accessed=(m_pad * d_in + m_pad * d_out_pad + 2 * d_in + d_out_pad)
        * itemsize + d_in * d_out_pad * w_itemsize,
    )

    def build(single_buffer):
        def spec(shape, index_map, invariant):
            if single_buffer and invariant:
                return pl.BlockSpec(shape, index_map,
                                    pipeline_mode=pl.Buffered(1))
            return pl.BlockSpec(shape, index_map)

        w_buffers = 1 if (single_buffer and not w_tiled) else 2
        return pl.pallas_call(
            _prenorm_linear_kernel,
            out_shape=jax.ShapeDtypeStruct((m_pad, d_out_pad), x.dtype),
            grid_spec=pltpu.PrefetchScalarGridSpec(
                num_scalar_prefetch=0,
                grid=(m_pad // tm, d_out_pad // tn),
                in_specs=[
                    pl.BlockSpec((tm, d_in), lambda i, j: (i, 0)),
                    spec((1, d_in), lambda i, j: (0, 0), True),
                    spec((1, d_in), lambda i, j: (0, 0), True),
                    spec((d_in, tn), lambda i, j: (0, j), not w_tiled),
                    spec((1, tn), lambda i, j: (0, j), not w_tiled),
                ],
                out_specs=pl.BlockSpec((tm, tn), lambda i, j: (i, j)),
            ),
            compiler_params=pltpu.CompilerParams(
                dimension_semantics=("parallel", "parallel"),
                vmem_limit_bytes=_vmem_limit_bytes(
                    tm, d_in, tn, itemsize, w_itemsize, w_buffers),
            ),
            cost_estimate=cost,
        )

    out = _call_with_single_buffer_fallback(build, (x2, g2, b2, w_p, bias_p))
    return out[:m, :d_out].reshape(orig_shape[:-1] + (d_out,))


def layernorm_pallas(x, gamma, beta, *, tile_m=512):
    """Standalone LayerNorm over the last dim (for arbitrary `fn`)."""
    orig_shape = x.shape
    d = orig_shape[-1]
    x2 = x.reshape(-1, d)
    m = x2.shape[0]
    itemsize = jnp.dtype(x.dtype).itemsize

    tm = _pick_tile_m(m, tile_m, x.dtype)
    m_pad = _round_up(m, tm)
    if m_pad != m:
        x2 = jnp.pad(x2, ((0, m_pad - m), (0, 0)))

    g2 = gamma.reshape(1, d)
    b2 = beta.reshape(1, d)

    cost = pl.CostEstimate(
        flops=10 * m_pad * d,
        transcendentals=m_pad,
        bytes_accessed=(2 * m_pad * d + 2 * d) * itemsize,
    )

    def build(single_buffer):
        def spec(shape, index_map):
            if single_buffer:
                return pl.BlockSpec(shape, index_map,
                                    pipeline_mode=pl.Buffered(1))
            return pl.BlockSpec(shape, index_map)

        return pl.pallas_call(
            _layernorm_kernel,
            out_shape=jax.ShapeDtypeStruct((m_pad, d), x.dtype),
            grid_spec=pltpu.PrefetchScalarGridSpec(
                num_scalar_prefetch=0,
                grid=(m_pad // tm,),
                in_specs=[
                    pl.BlockSpec((tm, d), lambda i: (i, 0)),
                    spec((1, d), lambda i: (0, 0)),
                    spec((1, d), lambda i: (0, 0)),
                ],
                out_specs=pl.BlockSpec((tm, d), lambda i: (i, 0)),
            ),
            compiler_params=pltpu.CompilerParams(
                dimension_semantics=("parallel",),
                vmem_limit_bytes=_vmem_limit_bytes(tm, d, d, itemsize, 0, 0),
            ),
            cost_estimate=cost,
        )

    out = _call_with_single_buffer_fallback(build, (x2, g2, b2))
    return out[:m].reshape(orig_shape)


def pre_norm(x, gamma, beta, fn, **kwargs):
    """Generic PreNorm.forward: fn(LayerNorm(x), **kwargs).
    Route Linear `fn` through prenorm_linear_pallas at call sites instead."""
    # TODO(synk): fusion only covers fn == Linear; arbitrary fn composes with
    # the standalone LayerNorm kernel here.
    return fn(layernorm_pallas(x, gamma, beta), **kwargs)


# ----------------------------- demo / main ------------------------------------


if __name__ == "__main__":
    # ViT-like token layout: batch=2, 65 tokens (64 patches + cls), dim=128
    # (lane-dense feature dim; 130 total rows exercises the padding path).
    B, N, D = 2, 65, 128

    key = jax.random.PRNGKey(0)
    kx, kw, kb = jax.random.split(key, 3)

    x = jax.random.normal(kx, (B, N, D), dtype=jnp.float32)
    gamma = jnp.ones((D,), dtype=jnp.float32) * 1.1
    beta = jnp.full((D,), 0.05, dtype=jnp.float32)
    w = jax.random.normal(kw, (D, D), dtype=jnp.float32) * 0.02
    b = jax.random.normal(kb, (D,), dtype=jnp.float32) * 0.02

    # Pure-JAX f32 reference.
    mean = jnp.mean(x, axis=-1, keepdims=True)
    var = jnp.mean(jnp.square(x - mean), axis=-1, keepdims=True)
    xn = (x - mean) / jnp.sqrt(var + EPS) * gamma + beta
    ref = xn @ w + b

    # Fused PreNorm + Linear, bf16 MXU feed (production default).
    out_bf16 = jax.block_until_ready(prenorm_linear_pallas(x, gamma, beta, w, b))
    # Fused PreNorm + Linear, full f32 (tight numerical check of the LN math).
    out_f32 = jax.block_until_ready(
        prenorm_linear_pallas(x, gamma, beta, w, b, mxu_dtype=jnp.float32))
    # Generic PreNorm path (standalone LN kernel + arbitrary fn).
    out_generic = jax.block_until_ready(
        pre_norm(x, gamma, beta, lambda y: y @ w + b))

    assert out_bf16.shape == (B, N, D)
    assert out_f32.shape == (B, N, D)
    assert out_generic.shape == (B, N, D)

    err_f32 = float(jnp.max(jnp.abs(out_f32 - ref)))
    err_gen = float(jnp.max(jnp.abs(out_generic - ref)))
    err_bf16 = float(jnp.max(jnp.abs(out_bf16 - ref)))
    assert err_f32 < 2e-3, err_f32
    assert err_gen < 2e-3, err_gen
    assert err_bf16 < 1.5e-2, err_bf16   # bf16 weight/activation rounding

    print("KERNEL_OK")
</pallas_src>

<mosaic_0001>
module attributes {stable_mosaic.version = 11 : i64} {
  func.func @_prenorm_linear_kernel(%arg0: i32, %arg1: i32, %arg2: memref<128x128xf32, #tpu.memory_space<vmem>>, %arg3: memref<1x128xf32, #tpu.memory_space<vmem>>, %arg4: memref<1x128xf32, #tpu.memory_space<vmem>>, %arg5: memref<128x128xbf16, #tpu.memory_space<vmem>>, %arg6: memref<1x128xf32, #tpu.memory_space<vmem>>, %arg7: memref<128x128xf32, #tpu.memory_space<vmem>>) attributes {dimension_semantics = [#tpu.dimension_semantics<parallel>, #tpu.dimension_semantics<parallel>], iteration_bounds = array<i64: 2, 1>, scalar_prefetch = 0 : i64, scratch_operands = 0 : i64, tpu.core_type = #tpu.core_type<tc>, window_params = [{transform_indices = @transform_0, window_bounds = array<i64: 128, 128>}, {pipeline_mode = #tpu.pipeline_mode<synchronous>, transform_indices = @transform_1, window_bounds = array<i64: 1, 128>}, {pipeline_mode = #tpu.pipeline_mode<synchronous>, transform_indices = @transform_2, window_bounds = array<i64: 1, 128>}, {pipeline_mode = #tpu.pipeline_mode<synchronous>, transform_indices = @transform_3, window_bounds = array<i64: 128, 128>}, {pipeline_mode = #tpu.pipeline_mode<synchronous>, transform_indices = @transform_4, window_bounds = array<i64: 1, 128>}, {transform_indices = @transform_5, window_bounds = array<i64: 128, 128>}]} {
    %c0 = arith.constant 0 : index
    %c0_0 = arith.constant 0 : index
    %0 = vector.load %arg2[%c0, %c0_0] : memref<128x128xf32, #tpu.memory_space<vmem>>, vector<128x128xf32>
    %c0_1 = arith.constant 0 : index
    %c0_2 = arith.constant 0 : index
    %1 = vector.load %arg3[%c0_1, %c0_2] : memref<1x128xf32, #tpu.memory_space<vmem>>, vector<1x128xf32>
    %c0_3 = arith.constant 0 : index
    %c0_4 = arith.constant 0 : index
    %2 = vector.load %arg4[%c0_3, %c0_4] : memref<1x128xf32, #tpu.memory_space<vmem>>, vector<1x128xf32>
    %cst = arith.constant dense<0.000000e+00> : vector<128xf32>
    %3 = vector.multi_reduction <add>, %0, %cst [1] : vector<128x128xf32> to vector<128xf32>
    %4 = vector.shape_cast %3 : vector<128xf32> to vector<128x1xf32>
    %cst_5 = arith.constant 7.812500e-03 : f32
    %5 = vector.broadcast %cst_5 : f32 to vector<128x1xf32>
    %6 = arith.mulf %4, %5 : vector<128x1xf32>
    %7 = vector.broadcast %6 : vector<128x1xf32> to vector<128x128xf32>
    %8 = arith.subf %0, %7 : vector<128x128xf32>
    %9 = arith.mulf %8, %8 : vector<128x128xf32>
    %cst_6 = arith.constant dense<0.000000e+00> : vector<128xf32>
    %10 = vector.multi_reduction <add>, %9, %cst_6 [1] : vector<128x128xf32> to vector<128xf32>
    %11 = vector.shape_cast %10 : vector<128xf32> to vector<128x1xf32>
    %cst_7 = arith.constant 7.812500e-03 : f32
    %12 = vector.broadcast %cst_7 : f32 to vector<128x1xf32>
    %13 = arith.mulf %11, %12 : vector<128x1xf32>
    %cst_8 = arith.constant 9.99999974E-6 : f32
    %14 = vector.broadcast %cst_8 : f32 to vector<128x1xf32>
    %15 = arith.addf %13, %14 : vector<128x1xf32>
    %16 = math.rsqrt %15 : vector<128x1xf32>
    %17 = vector.broadcast %16 : vector<128x1xf32> to vector<128x128xf32>
    %18 = arith.mulf %8, %17 : vector<128x128xf32>
    %19 = vector.broadcast %1 : vector<1x128xf32> to vector<128x128xf32>
    %20 = arith.mulf %18, %19 : vector<128x128xf32>
    %21 = vector.broadcast %2 : vector<1x128xf32> to vector<128x128xf32>
    %22 = arith.addf %20, %21 : vector<128x128xf32>
    %23 = arith.truncf %22 : vector<128x128xf32> to vector<128x128xbf16>
    %c0_9 = arith.constant 0 : index
    %c0_10 = arith.constant 0 : index
    %24 = vector.load %arg5[%c0_9, %c0_10] : memref<128x128xbf16, #tpu.memory_space<vmem>>, vector<128x128xbf16>
    %cst_11 = arith.constant dense<0.000000e+00> : vector<128x128xf32>
    %25 = tpu.matmul %23, %24, %cst_11 {dimension_numbers = #tpu.dot_dimension_numbers<[1], [0], [0], [1], [0, 0, 1, 1], [], []>} : vector<128x128xbf16>, vector<128x128xbf16>, vector<128x128xf32> -> vector<128x128xf32>
    %c0_12 = arith.constant 0 : index
    %c0_13 = arith.constant 0 : index
    %26 = vector.load %arg6[%c0_12, %c0_13] : memref<1x128xf32, #tpu.memory_space<vmem>>, vector<1x128xf32>
    %27 = vector.broadcast %26 : vector<1x128xf32> to vector<128x128xf32>
    %28 = arith.addf %25, %27 : vector<128x128xf32>
    %c0_14 = arith.constant 0 : index
    %c0_15 = arith.constant 0 : index
    %29 = vector.load %arg7[%c0_14, %c0_15] : memref<128x128xf32, #tpu.memory_space<vmem>>, vector<128x128xf32>
    tpu.vector_store %arg7[%c0_14, %c0_15], %28 {strides = array<i32>} : memref<128x128xf32, #tpu.memory_space<vmem>>, vector<128x128xf32>,
    return
  }
  func.func @transform_0(%arg0: i32, %arg1: i32) -> (i32, i32) {
    %c0_i32 = arith.constant 0 : i32
    %c0_i32_0 = arith.constant 0 : i32
    return %arg0, %c0_i32 : i32, i32
  }
  func.func @transform_1(%arg0: i32, %arg1: i32) -> (i32, i32) {
    %c0_i32 = arith.constant 0 : i32
    %c0_i32_0 = arith.constant 0 : i32
    %c0_i32_1 = arith.constant 0 : i32
    return %c0_i32, %c0_i32_0 : i32, i32
  }
  func.func @transform_2(%arg0: i32, %arg1: i32) -> (i32, i32) {
    %c0_i32 = arith.constant 0 : i32
    %c0_i32_0 = arith.constant 0 : i32
    %c0_i32_1 = arith.constant 0 : i32
    return %c0_i32, %c0_i32_0 : i32, i32
  }
  func.func @transform_3(%arg0: i32, %arg1: i32) -> (i32, i32) {
    %c0_i32 = arith.constant 0 : i32
    %c0_i32_0 = arith.constant 0 : i32
    return %c0_i32, %arg1 : i32, i32
  }
  func.func @transform_4(%arg0: i32, %arg1: i32) -> (i32, i32) {
    %c0_i32 = arith.constant 0 : i32
    %c0_i32_0 = arith.constant 0 : i32
    return %c0_i32, %arg1 : i32, i32
  }
  func.func @transform_5(%arg0: i32, %arg1: i32) -> (i32, i32) {
    %c0_i32 = arith.constant 0 : i32
    return %arg0, %arg1 : i32, i32
  }
}

module attributes {stable_mosaic.version = 11 : i64} {
  func.func @_prenorm_linear_kernel(%arg0: i32, %arg1: i32, %arg2: memref<128x128xf32, #tpu.memory_space<vmem>>, %arg3: memref<1x128xf32, #tpu.memory_space<vmem>>, %arg4: memref<1x128xf32, #tpu.memory_space<vmem>>, %arg5: memref<128x128xbf16, #tpu.memory_space<vmem>>, %arg6: memref<1x128xf32, #tpu.memory_space<vmem>>, %arg7: memref<128x128xf32, #tpu.memory_space<vmem>>) attributes {dimension_semantics = [#tpu.dimension_semantics<parallel>, #tpu.dimension_semantics<parallel>], iteration_bounds = array<i64: 2, 1>, scalar_prefetch = 0 : i64, scratch_operands = 0 : i64, tpu.core_type = #tpu.core_type<tc>, window_params = [{transform_indices = @transform_0, window_bounds = array<i64: 128, 128>}, {pipeline_mode = #tpu.pipeline_mode<synchronous>, transform_indices = @transform_1, window_bounds = array<i64: 1, 128>}, {pipeline_mode = #tpu.pipeline_mode<synchronous>, transform_indices = @transform_2, window_bounds = array<i64: 1, 128>}, {transform_indices = @transform_3, window_bounds = array<i64: 128, 128>}, {transform_indices = @transform_4, window_bounds = array<i64: 1, 128>}, {transform_indices = @transform_5, window_bounds = array<i64: 128, 128>}]} {
    %c0 = arith.constant 0 : index
    %c0_0 = arith.constant 0 : index
    %0 = vector.load %arg2[%c0, %c0_0] : memref<128x128xf32, #tpu.memory_space<vmem>>, vector<128x128xf32>
    %c0_1 = arith.constant 0 : index
    %c0_2 = arith.constant 0 : index
    %1 = vector.load %arg3[%c0_1, %c0_2] : memref<1x128xf32, #tpu.memory_space<vmem>>, vector<1x128xf32>
    %c0_3 = arith.constant 0 : index
    %c0_4 = arith.constant 0 : index
    %2 = vector.load %arg4[%c0_3, %c0_4] : memref<1x128xf32, #tpu.memory_space<vmem>>, vector<1x128xf32>
    %cst = arith.constant dense<0.000000e+00> : vector<128xf32>
    %3 = vector.multi_reduction <add>, %0, %cst [1] : vector<128x128xf32> to vector<128xf32>
    %4 = vector.shape_cast %3 : vector<128xf32> to vector<128x1xf32>
    %cst_5 = arith.constant 7.812500e-03 : f32
    %5 = vector.broadcast %cst_5 : f32 to vector<128x1xf32>
    %6 = arith.mulf %4, %5 : vector<128x1xf32>
    %7 = vector.broadcast %6 : vector<128x1xf32> to vector<128x128xf32>
    %8 = arith.subf %0, %7 : vector<128x128xf32>
    %9 = arith.mulf %8, %8 : vector<128x128xf32>
    %cst_6 = arith.constant dense<0.000000e+00> : vector<128xf32>
    %10 = vector.multi_reduction <add>, %9, %cst_6 [1] : vector<128x128xf32> to vector<128xf32>
    %11 = vector.shape_cast %10 : vector<128xf32> to vector<128x1xf32>
    %cst_7 = arith.constant 7.812500e-03 : f32
    %12 = vector.broadcast %cst_7 : f32 to vector<128x1xf32>
    %13 = arith.mulf %11, %12 : vector<128x1xf32>
    %cst_8 = arith.constant 9.99999974E-6 : f32
    %14 = vector.broadcast %cst_8 : f32 to vector<128x1xf32>
    %15 = arith.addf %13, %14 : vector<128x1xf32>
    %16 = math.rsqrt %15 : vector<128x1xf32>
    %17 = vector.broadcast %16 : vector<128x1xf32> to vector<128x128xf32>
    %18 = arith.mulf %8, %17 : vector<128x128xf32>
    %19 = vector.broadcast %1 : vector<1x128xf32> to vector<128x128xf32>
    %20 = arith.mulf %18, %19 : vector<128x128xf32>
    %21 = vector.broadcast %2 : vector<1x128xf32> to vector<128x128xf32>
    %22 = arith.addf %20, %21 : vector<128x128xf32>
    %23 = arith.truncf %22 : vector<128x128xf32> to vector<128x128xbf16>
    %c0_9 = arith.constant 0 : index
    %c0_10 = arith.constant 0 : index
    %24 = vector.load %arg5[%c0_9, %c0_10] : memref<128x128xbf16, #tpu.memory_space<vmem>>, vector<128x128xbf16>
    %cst_11 = arith.constant dense<0.000000e+00> : vector<128x128xf32>
    %25 = tpu.matmul %23, %24, %cst_11 {dimension_numbers = #tpu.dot_dimension_numbers<[1], [0], [0], [1], [0, 0, 1, 1], [], []>} : vector<128x128xbf16>, vector<128x128xbf16>, vector<128x128xf32> -> vector<128x128xf32>
    %c0_12 = arith.constant 0 : index
    %c0_13 = arith.constant 0 : index
    %26 = vector.load %arg6[%c0_12, %c0_13] : memref<1x128xf32, #tpu.memory_space<vmem>>, vector<1x128xf32>
    %27 = vector.broadcast %26 : vector<1x128xf32> to vector<128x128xf32>
    %28 = arith.addf %25, %27 : vector<128x128xf32>
    %c0_14 = arith.constant 0 : index
    %c0_15 = arith.constant 0 : index
    %29 = vector.load %arg7[%c0_14, %c0_15] : memref<128x128xf32, #tpu.memory_space<vmem>>, vector<128x128xf32>
    tpu.vector_store %arg7[%c0_14, %c0_15], %28 {strides = array<i32>} : memref<128x128xf32, #tpu.memory_space<vmem>>, vector<128x128xf32>,
    return
  }
  func.func @transform_0(%arg0: i32, %arg1: i32) -> (i32, i32) {
    %c0_i32 = arith.constant 0 : i32
    %c0_i32_0 = arith.constant 0 : i32
    return %arg0, %c0_i32 : i32, i32
  }
  func.func @transform_1(%arg0: i32, %arg1: i32) -> (i32, i32) {
    %c0_i32 = arith.constant 0 : i32
    %c0_i32_0 = arith.constant 0 : i32
    %c0_i32_1 = arith.constant 0 : i32
    return %c0_i32, %c0_i32_0 : i32, i32
  }
  func.func @transform_2(%arg0: i32, %arg1: i32) -> (i32, i32) {
    %c0_i32 = arith.constant 0 : i32
    %c0_i32_0 = arith.constant 0 : i32
    %c0_i32_1 = arith.constant 0 : i32
    return %c0_i32, %c0_i32_0 : i32, i32
  }
  func.func @transform_3(%arg0: i32, %arg1: i32) -> (i32, i32) {
    %c0_i32 = arith.constant 0 : i32
    %c0_i32_0 = arith.constant 0 : i32
    return %c0_i32, %arg1 : i32, i32
  }
  func.func @transform_4(%arg0: i32, %arg1: i32) -> (i32, i32) {
    %c0_i32 = arith.constant 0 : i32
    %c0_i32_0 = arith.constant 0 : i32
    return %c0_i32, %arg1 : i32, i32
  }
  func.func @transform_5(%arg0: i32, %arg1: i32) -> (i32, i32) {
    %c0_i32 = arith.constant 0 : i32
    return %arg0, %arg1 : i32, i32
  }
}

</mosaic_0001>

<llo_original>
// kernel: tpu_custom_call.1
$region0: #{tpu_custom_call.1}
  #allocation0 [shape = 'u32[]', space=smem, size = 0x4, offset = 0x4, fixed_abs, tag = 'smem constant byte address 0x4 - core index']
  #allocation1 [shape = 'u32[144,128]{1,0:T(1,128)}', space=vmem, size = 0x12000, scoped, tag = 'internal scratch']
  %s0 = inlined_call_operand.hbm [shape: f32[256,128], index: 0, kind: input, shape index: {}]
  %s1 = inlined_call_operand.vmem [shape: f32[1,128], index: 1, kind: input, shape index: {}]
  %s2 = inlined_call_operand.vmem [shape: f32[1,128], index: 2, kind: input, shape index: {}]
  %s3 = inlined_call_operand.hbm [shape: bf16[128,128], index: 3, kind: input, shape index: {}]
  %s4 = inlined_call_operand.vmem [shape: f32[1,128], index: 4, kind: input, shape index: {}]
  %s5 = inlined_call_operand.hbm [shape: f32[256,128], index: 5, kind: output, shape index: {}]
  %s6 = sld [smem:[#allocation0]]
  $region61: #{tpu_custom_call.1} parent=0
    _
  %s8 = ssub.s32 1, %s6
  %s9 = scalar_select 0, %s8, %s6
  $region1: #{tpu_custom_call.1} parent=0
    #allocation2 [shape = 'u8[131072]{0}', space=vmem, size = 0x20000, scoped, tag = 'input window, operand 0']
    #allocation3 [shape = 's32[2]{0}', space=sflag, size = 0x8, scoped, tag = 'scoped memory for tpu_custom_call.1']
    #allocation4 [shape = 's32[2]{0}', space=sflag, size = 0x8, scoped, tag = 'scoped memory for tpu_custom_call.1']
    #allocation5 [shape = 'u8[32768]{0}', space=vmem, size = 0x8000, scoped, tag = 'input window, operand 3, single buffered']
    #allocation6 [shape = 's32[1]{0}', space=sflag, size = 0x4, scoped, tag = 'scoped memory for tpu_custom_call.1']
    #allocation7 [shape = 'u8[131072]{0}', space=vmem, size = 0x20000, scoped, tag = 'output window, operand 0']
    %10 = vsyncpa [#allocation3], 0
    %s11 = scalar_lea.sflag [#allocation3], 1
    %12 = vsyncpa %s11, 0
    %13 = vsyncpa [#allocation6], 0
    %14 = vsyncpa [#allocation4], 0
    %s15 = scalar_lea.sflag [#allocation4], 1
    %16 = vsyncpa %s15, 0
    loop: start=0, step=1, limit=4
    $region2: #{tpu_custom_call.1} parent=1 // loop_pre_header
      _
    $region3: #{tpu_custom_call.1} parent=1 // loop_header
      %s18 = sphi 0, %s22
      %p19 = scmp.ge.s32.totalorder %s18, 4
      %s25 = sphi 0, %s37
      %s26 = sphi 0, %s33
      %s27 = sphi 0, %s25
      %s28 = sphi 0, %s26
      %s29 = sphi 0, %s27
      %s30 = sphi 0, %s28
      %s40 = sphi 0, %s42
      %s43 = sphi 0, %s40
      %s44 = sphi 0, %s43
      %s60 = sphi 0, %s44
      %s64 = sphi 0, %s64
      %s66 = sphi 0, %s64
      %s67 = sphi 0, %s66
      %s81 = sphi 0, %s67
      %s85 = sphi 0, %s85
      %s87 = sphi 0, %s85
      %s88 = sphi 0, %s87
      %s102 = sphi 0, %s88
      %s108 = sphi 0, %s110
      %s111 = sphi 0, %s108
      %s112 = sphi 0, %s111
      %s128 = sphi 0, %s112
      %s134 = sphi 0, %s136
      %s137 = sphi 0, %s134
      %s138 = sphi 0, %s137
      %s154 = sphi 0, %s138
      %s162 = sphi 0, %s164
      %s165 = sphi 0, %s162
      %s166 = sphi 0, %s165
      %s182 = sphi 0, %s166
    $region4: #{tpu_custom_call.1} parent=1 // loop_header_branch
      %21 = sbr.rel (%p19) target = $region8
    $region5: #{tpu_custom_call.1} parent=1 // loop_body
      %s23 = ssub.s32 %s18, 1
      %s24 = ssub.s32 %s18, 2
      %s31 = sadd.s32 1, %s26
      %p32 = scmp.ge.s32.totalorder %s31, 1
      %s33 = scalar_select %p32, 0, %s31
      %s34 = sadd.s32 1, %s25
      %s35 = scalar_select %p32, %s34, %s25
      %p36 = scmp.ge.s32.totalorder %s35, 2
      %s37 = scalar_select %p36, 0, %s35
      %s38 = ssub.s32 %s25, %s37
      %p39 = scmp.eq.s32.totalorder %s38, 0
      %s41 = sadd.s32 %s40, 1
      %s42 = scalar_select %p39, %s40, %s41
      %p45 = pneg %p39
      %p46 = scmp.eq.s32.totalorder %s18, 1
      %p47 = por %p45, %p46
      %p48 = scmp.ne.s32.totalorder %s40, %s43
      %p49 = scmp.eq.s32.totalorder %s18, 0
      %p50 = por %p48, %p49
      %p51 = scmp.ne.s32.totalorder %s40, %s43
      %p52 = scmp.eq.s32.totalorder %s23, 1
      %p53 = por %p51, %p52
      %p54 = scmp.ne.s32.totalorder %s43, %s44
      %p55 = scmp.eq.s32.totalorder %s23, 0
      %p56 = por %p54, %p55
      %p57 = scmp.ne.s32.totalorder %s43, %s44
      %p58 = scmp.eq.s32.totalorder %s24, 1
      %p59 = por %p57, %p58
      %p61 = scmp.ne.s32.totalorder %s44, %s60
      %p62 = scmp.eq.s32.totalorder %s24, 0
      %p63 = por %p61, %p62
      %s65 = sadd.s32 %s64, 1
      %p68 = scmp.eq.s32.totalorder %s18, 1
      %p69 = scmp.ne.s32.totalorder %s64, %s66
      %p70 = scmp.eq.s32.totalorder %s18, 0
      %p71 = por %p69, %p70
      %p72 = scmp.ne.s32.totalorder %s64, %s66
      %p73 = scmp.eq.s32.totalorder %s23, 1
      %p74 = por %p72, %p73
      %p75 = scmp.ne.s32.totalorder %s66, %s67
      %p76 = scmp.eq.s32.totalorder %s23, 0
      %p77 = por %p75, %p76
      %p78 = scmp.ne.s32.totalorder %s66, %s67
      %p79 = scmp.eq.s32.totalorder %s24, 1
      %p80 = por %p78, %p79
      %p82 = scmp.ne.s32.totalorder %s67, %s81
      %p83 = scmp.eq.s32.totalorder %s24, 0
      %p84 = por %p82, %p83
      %s86 = sadd.s32 %s85, 1
      %p89 = scmp.eq.s32.totalorder %s18, 1
      %p90 = scmp.ne.s32.totalorder %s85, %s87
      %p91 = scmp.eq.s32.totalorder %s18, 0
      %p92 = por %p90, %p91
      %p93 = scmp.ne.s32.totalorder %s85, %s87
      %p94 = scmp.eq.s32.totalorder %s23, 1
      %p95 = por %p93, %p94
      %p96 = scmp.ne.s32.totalorder %s87, %s88
      %p97 = scmp.eq.s32.totalorder %s23, 0
      %p98 = por %p96, %p97
      %p99 = scmp.ne.s32.totalorder %s87, %s88
      %p100 = scmp.eq.s32.totalorder %s24, 1
      %p101 = por %p99, %p100
      %p103 = scmp.ne.s32.totalorder %s88, %s102
      %p104 = scmp.eq.s32.totalorder %s24, 0
      %p105 = por %p103, %p104
      %s106 = ssub.s32 %s26, %s33
      %p107 = scmp.eq.s32.totalorder %s106, 0
      %s109 = sadd.s32 %s108, 1
      %s110 = scalar_select %p107, %s108, %s109
      %p113 = pneg %p107
      %p114 = scmp.eq.s32.totalorder %s18, 1
      %p115 = por %p113, %p114
      %p116 = scmp.ne.s32.totalorder %s108, %s111
      %p117 = scmp.eq.s32.totalorder %s18, 0
      %p118 = por %p116, %p117
      %p119 = scmp.ne.s32.totalorder %s108, %s111
      %p120 = scmp.eq.s32.totalorder %s23, 1
      %p121 = por %p119, %p120
      %p122 = scmp.ne.s32.totalorder %s111, %s112
      %p123 = scmp.eq.s32.totalorder %s23, 0
      %p124 = por %p122, %p123
      %p125 = scmp.ne.s32.totalorder %s111, %s112
      %p126 = scmp.eq.s32.totalorder %s24, 1
      %p127 = por %p125, %p126
      %p129 = scmp.ne.s32.totalorder %s112, %s128
      %p130 = scmp.eq.s32.totalorder %s24, 0
      %p131 = por %p129, %p130
      %s132 = ssub.s32 %s26, %s33
      %p133 = scmp.eq.s32.totalorder %s132, 0
      %s135 = sadd.s32 %s134, 1
      %s136 = scalar_select %p133, %s134, %s135
      %p139 = pneg %p133
      %p140 = scmp.eq.s32.totalorder %s18, 1
      %p141 = por %p139, %p140
      %p142 = scmp.ne.s32.totalorder %s134, %s137
      %p143 = scmp.eq.s32.totalorder %s18, 0
      %p144 = por %p142, %p143
      %p145 = scmp.ne.s32.totalorder %s134, %s137
      %p146 = scmp.eq.s32.totalorder %s23, 1
      %p147 = por %p145, %p146
      %p148 = scmp.ne.s32.totalorder %s137, %s138
      %p149 = scmp.eq.s32.totalorder %s23, 0
      %p150 = por %p148, %p149
      %p151 = scmp.ne.s32.totalorder %s137, %s138
      %p152 = scmp.eq.s32.totalorder %s24, 1
      %p153 = por %p151, %p152
      %p155 = scmp.ne.s32.totalorder %s138, %s154
      %p156 = scmp.eq.s32.totalorder %s24, 0
      %p157 = por %p155, %p156
      %s158 = ssub.s32 %s25, %s37
      %s159 = ssub.s32 %s26, %s33
      %s160 = sor.u32 %s158, %s159
      %p161 = scmp.eq.s32.totalorder %s160, 0
      %s163 = sadd.s32 %s162, 1
      %s164 = scalar_select %p161, %s162, %s163
      %p167 = pneg %p161
      %p168 = scmp.eq.s32.totalorder %s18, 1
      %p169 = por %p167, %p168
      %p170 = scmp.ne.s32.totalorder %s162, %s165
      %p171 = scmp.eq.s32.totalorder %s18, 0
      %p172 = por %p170, %p171
      %p173 = scmp.ne.s32.totalorder %s162, %s165
      %p174 = scmp.eq.s32.totalorder %s23, 1
      %p175 = por %p173, %p174
      %p176 = scmp.ne.s32.totalorder %s165, %s166
      %p177 = scmp.eq.s32.totalorder %s23, 0
      %p178 = por %p176, %p177
      %p179 = scmp.ne.s32.totalorder %s165, %s166
      %p180 = scmp.eq.s32.totalorder %s24, 1
      %p181 = por %p179, %p180
      %p183 = scmp.ne.s32.totalorder %s166, %s182
      %p184 = scmp.eq.s32.totalorder %s24, 0
      %p185 = por %p183, %p184
      %p186 = scmp.le.s32.totalorder 1, %s18
      %p187 = scmp.lt.s32.totalorder %s18, 3
      %p188 = pnand %p186, %p187
      %p189 = pneg %p188
      // Predicated region
      $region9: #{tpu_custom_call.1} parent=5 // pred_check
        _
      $region10: #{tpu_custom_call.1} parent=5 // pred_check_branch
        %191 = sbr.rel (%p188) target = $region12
      $region11: #{tpu_custom_call.1} parent=5 // pred_region
        %s192 = ssub.s32 %s18, 1
        // Predicated region
        $region13: #{tpu_custom_call.1} parent=11 // pred_check
          %p193 = pneg %p77
        $region14: #{tpu_custom_call.1} parent=11 // pred_check_branch
          %195 = sbr.rel (%p193) target = $region16
        $region15: #{tpu_custom_call.1} parent=11 // pred_region
          _
        $region16: #{tpu_custom_call.1} parent=11 // pred_fallthru
          _
        // Predicated region
        $region17: #{tpu_custom_call.1} parent=11 // pred_check
          %p196 = pneg %p98
        $region18: #{tpu_custom_call.1} parent=11 // pred_check_branch
          %198 = sbr.rel (%p196) target = $region20
        $region19: #{tpu_custom_call.1} parent=11 // pred_region
          _
        $region20: #{tpu_custom_call.1} parent=11 // pred_fallthru
          _
        // Predicated region
        $region21: #{tpu_custom_call.1} parent=11 // pred_check
          %p199 = pneg %p124
        $region22: #{tpu_custom_call.1} parent=11 // pred_check_branch
          %201 = sbr.rel (%p199) target = $region24
        $region23: #{tpu_custom_call.1} parent=11 // pred_region
          %s203 = ssub.s32 1024, 1024
          %204 = vsyncadd [#allocation6], %s203
          %s205 = smul.addr %s28, 64
          %s206 = scalar_lea.hbm %s3, %s205
          %s207 = sshll.u32 [#allocation5], 4
          %s208 = int_to_ptr.vmem [resolvable:$true] %s207
          %213 = dma.hbm_to_vmem [thread:$0]  %s206, 1024, %s208, [#allocation6], 64, 64, 4
        $region24: #{tpu_custom_call.1} parent=11 // pred_fallthru
          _
        // Predicated region
        $region25: #{tpu_custom_call.1} parent=11 // pred_check
          %p214 = pneg %p150
        $region26: #{tpu_custom_call.1} parent=11 // pred_check_branch
          %216 = sbr.rel (%p214) target = $region28
        $region27: #{tpu_custom_call.1} parent=11 // pred_region
          %p217 = scmp.lt.s32.totalorder %s28, 0
          %s218 = scalar_select %p217, %s28, 0
          %s219 = scalar_lea.vmem %s4, %s218
        $region28: #{tpu_custom_call.1} parent=11 // pred_fallthru
          _
      $region12: #{tpu_custom_call.1} parent=5 // pred_fallthru
        _
      %p220 = scmp.lt.s32.totalorder %s18, 2
      // Predicated region
      $region29: #{tpu_custom_call.1} parent=5 // pred_check
        %p221 = pneg %p220
      $region30: #{tpu_custom_call.1} parent=5 // pred_check_branch
        %223 = sbr.rel (%p221) target = $region32
      $region31: #{tpu_custom_call.1} parent=5 // pred_region
        // Predicated region
        $region33: #{tpu_custom_call.1} parent=31 // pred_check
          %p224 = pneg %p50
        $region34: #{tpu_custom_call.1} parent=31 // pred_check_branch
          %226 = sbr.rel (%p224) target = $region36
        $region35: #{tpu_custom_call.1} parent=31 // pred_region
          %s227 = sand.u32 %s40, 1
          %s228 = scalar_lea.sflag [#allocation3], %s227
          %s229 = sand.u32 %s40, 1
          %s230 = smul.addr %s229, 128
          %s231 = scalar_lea.vmem [#allocation2], %s230
          %s232 = smul.u32 16, %s25
          %s234 = ssub.s32 2048, 2048
          %235 = vsyncadd %s228, %s234
          %s236 = smul.addr %s232, 128
          %s237 = scalar_lea.hbm %s0, %s236
          %s238 = sshll.u32 %s231, 4
          %s239 = int_to_ptr.vmem [resolvable:$true] %s238
          %244 = dma.hbm_to_vmem [thread:$0]  %s237, 2048, %s239, %s228, 128, 128, 8
        $region36: #{tpu_custom_call.1} parent=31 // pred_fallthru
          _
      $region32: #{tpu_custom_call.1} parent=5 // pred_fallthru
        _
      %p245 = scmp.le.s32.totalorder 1, %s18
      %p246 = scmp.lt.s32.totalorder %s18, 3
      %p247 = pnand %p245, %p246
      %p248 = pneg %p247
      // Predicated region
      $region37: #{tpu_custom_call.1} parent=5 // pred_check
        _
      $region38: #{tpu_custom_call.1} parent=5 // pred_check_branch
        %250 = sbr.rel (%p247) target = $region40
      $region39: #{tpu_custom_call.1} parent=5 // pred_region
        %s251 = ssub.s32 %s18, 1
        %s252 = sand.u32 %s43, 1
        %s253 = scalar_lea.sflag [#allocation3], %s252
        %s254 = sand.u32 %s43, 1
        %s255 = smul.addr %s254, 128
        %s256 = scalar_lea.vmem [#allocation2], %s255
        // Predicated region
        $region41: #{tpu_custom_call.1} parent=39 // pred_check
          %p257 = pneg %p56
        $region42: #{tpu_custom_call.1} parent=39 // pred_check_branch
          %259 = sbr.rel (%p257) target = $region44
        $region43: #{tpu_custom_call.1} parent=39 // pred_region
          %260 = dma.done %s253, 2048
        $region44: #{tpu_custom_call.1} parent=39 // pred_fallthru
          _
        // Predicated region
        $region45: #{tpu_custom_call.1} parent=39 // pred_check
          %p261 = pneg %p124
        $region46: #{tpu_custom_call.1} parent=39 // pred_check_branch
          %263 = sbr.rel (%p261) target = $region48
        $region47: #{tpu_custom_call.1} parent=39 // pred_region
          %264 = dma.done [#allocation6], 1024
        $region48: #{tpu_custom_call.1} parent=39 // pred_fallthru
          _
        %s265 = sand.u32 %s43, 1
        %s266 = scalar_lea.sflag [#allocation3], %s265
        %s267 = sand.u32 %s43, 1
        %s268 = smul.addr %s267, 128
        %s269 = scalar_lea.vmem [#allocation2], %s268
        %p270 = pneg %p56
        %p271 = pneg %p53
        %p272 = pneg %p77
        %p273 = pneg %p74
        %p274 = pneg %p98
        %p275 = pneg %p95
        %p276 = pneg %p124
        %p277 = pneg %p121
        %p278 = scmp.lt.s32.totalorder %s28, 0
        %s279 = scalar_select %p278, %s28, 0
        %s280 = scalar_lea.vmem %s4, %s279
        %p281 = pneg %p150
        %p282 = pneg %p147
        %p283 = pneg %p178
        %p284 = pneg %p175
        %s285 = sand.u32 %s165, 1
        %s286 = scalar_lea.sflag [#allocation4], %s285
        %s287 = sand.u32 %s165, 1
        %s288 = smul.addr %s287, 128
        %s289 = scalar_lea.vmem [#allocation7], %s288
        %s290 = smul.u32 16, %s27
        %p291 = scmp.lt.s32.totalorder %s28, 0
        %s292 = scalar_select %p291, %s28, 0
        %s293 = scalar_lea.vmem %s4, %s292
        %s294 = smul.u32 16, %s27
        %v296 = vld [vmem:[%s256] sm:$0xff]
        %v297 = vld [vmem:[%s256 + $0x8] sm:$0xff]
        %v298 = vld [vmem:[%s256 + $0x10] sm:$0xff]
        %v299 = vld [vmem:[%s256 + $0x18] sm:$0xff]
        %v300 = vld [vmem:[%s256 + $0x20] sm:$0xff]
        %v301 = vld [vmem:[%s256 + $0x28] sm:$0xff]
        %v302 = vld [vmem:[%s256 + $0x30] sm:$0xff]
        %v303 = vld [vmem:[%s256 + $0x38] sm:$0xff]
        %v304 = vld [vmem:[%s256 + $0x40] sm:$0xff]
        %v305 = vld [vmem:[%s256 + $0x48] sm:$0xff]
        %v306 = vld [vmem:[%s256 + $0x50] sm:$0xff]
        %v307 = vld [vmem:[%s256 + $0x58] sm:$0xff]
        %v308 = vld [vmem:[%s256 + $0x60] sm:$0xff]
        %v309 = vld [vmem:[%s256 + $0x68] sm:$0xff]
        %v310 = vld [vmem:[%s256 + $0x70] sm:$0xff]
        %v311 = vld [vmem:[%s256 + $0x78] sm:$0xff]
        %v312 = vld [vmem:[%s1] sm:$0x1]
        %v313 = vld [vmem:[%s2] sm:$0x1]
        %314 = vadd.xlane.f32.xlu0 %v296
        %v315 = vpop.xlane.xlu0 %314
        %316 = vadd.xlane.f32.xlu0 %v297
        %v317 = vpop.xlane.xlu0 %316
        %318 = vadd.xlane.f32.xlu0 %v298
        %v319 = vpop.xlane.xlu0 %318
        %320 = vadd.xlane.f32.xlu0 %v299
        %v321 = vpop.xlane.xlu0 %320
        %322 = vadd.xlane.f32.xlu0 %v300
        %v323 = vpop.xlane.xlu0 %322
        %324 = vadd.xlane.f32.xlu0 %v301
        %v325 = vpop.xlane.xlu0 %324
        %326 = vadd.xlane.f32.xlu0 %v302
        %v327 = vpop.xlane.xlu0 %326
        %328 = vadd.xlane.f32.xlu0 %v303
        %v329 = vpop.xlane.xlu0 %328
        %330 = vadd.xlane.f32.xlu0 %v304
        %v331 = vpop.xlane.xlu0 %330
        %332 = vadd.xlane.f32.xlu0 %v305
        %v333 = vpop.xlane.xlu0 %332
        %334 = vadd.xlane.f32.xlu0 %v306
        %v335 = vpop.xlane.xlu0 %334
        %336 = vadd.xlane.f32.xlu0 %v307
        %v337 = vpop.xlane.xlu0 %336
        %338 = vadd.xlane.f32.xlu0 %v308
        %v339 = vpop.xlane.xlu0 %338
        %340 = vadd.xlane.f32.xlu0 %v309
        %v341 = vpop.xlane.xlu0 %340
        %342 = vadd.xlane.f32.xlu0 %v310
        %v343 = vpop.xlane.xlu0 %342
        %344 = vadd.xlane.f32.xlu0 %v311
        %v345 = vpop.xlane.xlu0 %344
        %v346 = vmul.f32 %v315, 0.0078125
        %v347 = vmul.f32 %v317, 0.0078125
        %v348 = vmul.f32 %v319, 0.0078125
        %v349 = vmul.f32 %v321, 0.0078125
        %v350 = vmul.f32 %v323, 0.0078125
        %v351 = vmul.f32 %v325, 0.0078125
        %v352 = vmul.f32 %v327, 0.0078125
        %v353 = vmul.f32 %v329, 0.0078125
        %v354 = vmul.f32 %v331, 0.0078125
        %v355 = vmul.f32 %v333, 0.0078125
        %v356 = vmul.f32 %v335, 0.0078125
        %v357 = vmul.f32 %v337, 0.0078125
        %v358 = vmul.f32 %v339, 0.0078125
        %v359 = vmul.f32 %v341, 0.0078125
        %v360 = vmul.f32 %v343, 0.0078125
        %v361 = vmul.f32 %v345, 0.0078125
        %v362 = vsub.f32 %v296, %v346
        %v363 = vsub.f32 %v297, %v347
        %v364 = vsub.f32 %v298, %v348
        %v365 = vsub.f32 %v299, %v349
        %v366 = vsub.f32 %v300, %v350
        %v367 = vsub.f32 %v301, %v351
        %v368 = vsub.f32 %v302, %v352
        %v369 = vsub.f32 %v303, %v353
        %v370 = vsub.f32 %v304, %v354
        %v371 = vsub.f32 %v305, %v355
        %v372 = vsub.f32 %v306, %v356
        %v373 = vsub.f32 %v307, %v357
        %v374 = vsub.f32 %v308, %v358
        %v375 = vsub.f32 %v309, %v359
        %v376 = vsub.f32 %v310, %v360
        %v377 = vsub.f32 %v311, %v361
        %v378 = vmul.f32 %v362, %v362
        %v379 = vmul.f32 %v363, %v363
        %v380 = vmul.f32 %v364, %v364
        %v381 = vmul.f32 %v365, %v365
        %v382 = vmul.f32 %v366, %v366
        %v383 = vmul.f32 %v367, %v367
        %v384 = vmul.f32 %v368, %v368
        %v385 = vmul.f32 %v369, %v369
        %v386 = vmul.f32 %v370, %v370
        %v387 = vmul.f32 %v371, %v371
        %v388 = vmul.f32 %v372, %v372
        %v389 = vmul.f32 %v373, %v373
        %v390 = vmul.f32 %v374, %v374
        %v391 = vmul.f32 %v375, %v375
        %v392 = vmul.f32 %v376, %v376
        %v393 = vmul.f32 %v377, %v377
        %394 = vadd.xlane.f32.xlu0 %v378
        %v395 = vpop.xlane.xlu0 %394
        %396 = vadd.xlane.f32.xlu0 %v379
        %v397 = vpop.xlane.xlu0 %396
        %398 = vadd.xlane.f32.xlu0 %v380
        %v399 = vpop.xlane.xlu0 %398
        %400 = vadd.xlane.f32.xlu0 %v381
        %v401 = vpop.xlane.xlu0 %400
        %402 = vadd.xlane.f32.xlu0 %v382
        %v403 = vpop.xlane.xlu0 %402
        %404 = vadd.xlane.f32.xlu0 %v383
        %v405 = vpop.xlane.xlu0 %404
        %406 = vadd.xlane.f32.xlu0 %v384
        %v407 = vpop.xlane.xlu0 %406
        %408 = vadd.xlane.f32.xlu0 %v385
        %v409 = vpop.xlane.xlu0 %408
        %410 = vadd.xlane.f32.xlu0 %v386
        %v411 = vpop.xlane.xlu0 %410
        %412 = vadd.xlane.f32.xlu0 %v387
        %v413 = vpop.xlane.xlu0 %412
        %414 = vadd.xlane.f32.xlu0 %v388
        %v415 = vpop.xlane.xlu0 %414
        %416 = vadd.xlane.f32.xlu0 %v389
        %v417 = vpop.xlane.xlu0 %416
        %418 = vadd.xlane.f32.xlu0 %v390
        %v419 = vpop.xlane.xlu0 %418
        %420 = vadd.xlane.f32.xlu0 %v391
        %v421 = vpop.xlane.xlu0 %420
        %422 = vadd.xlane.f32.xlu0 %v392
        %v423 = vpop.xlane.xlu0 %422
        %424 = vadd.xlane.f32.xlu0 %v393
        %v425 = vpop.xlane.xlu0 %424
        %v426 = vmul.f32 %v395, 0.0078125
        %v427 = vmul.f32 %v397, 0.0078125
        %v428 = vmul.f32 %v399, 0.0078125
        %v429 = vmul.f32 %v401, 0.0078125
        %v430 = vmul.f32 %v403, 0.0078125
        %v431 = vmul.f32 %v405, 0.0078125
        %v432 = vmul.f32 %v407, 0.0078125
        %v433 = vmul.f32 %v409, 0.0078125
        %v434 = vmul.f32 %v411, 0.0078125
        %v435 = vmul.f32 %v413, 0.0078125
        %v436 = vmul.f32 %v415, 0.0078125
        %v437 = vmul.f32 %v417, 0.0078125
        %v438 = vmul.f32 %v419, 0.0078125
        %v439 = vmul.f32 %v421, 0.0078125
        %v440 = vmul.f32 %v423, 0.0078125
        %v441 = vmul.f32 %v425, 0.0078125
        %v442 = vadd.f32 %v426, 1e-05
        %v443 = vadd.f32 %v427, 1e-05
        %v444 = vadd.f32 %v428, 1e-05
        %v445 = vadd.f32 %v429, 1e-05
        %v446 = vadd.f32 %v430, 1e-05
        %v447 = vadd.f32 %v431, 1e-05
        %v448 = vadd.f32 %v432, 1e-05
        %v449 = vadd.f32 %v433, 1e-05
        %v450 = vadd.f32 %v434, 1e-05
        %v451 = vadd.f32 %v435, 1e-05
        %v452 = vadd.f32 %v436, 1e-05
        %v453 = vadd.f32 %v437, 1e-05
        %v454 = vadd.f32 %v438, 1e-05
        %v455 = vadd.f32 %v439, 1e-05
        %v456 = vadd.f32 %v440, 1e-05
        %v457 = vadd.f32 %v441, 1e-05
        %v458 = vrsqrt.pop %v442
        %v459 = vrsqrt.pop %v443
        %v460 = vrsqrt.pop %v444
        %v461 = vrsqrt.pop %v445
        %v462 = vrsqrt.pop %v446
        %v463 = vrsqrt.pop %v447
        %v464 = vrsqrt.pop %v448
        %v465 = vrsqrt.pop %v449
        %v466 = vrsqrt.pop %v450
        %v467 = vrsqrt.pop %v451
        %v468 = vrsqrt.pop %v452
        %v469 = vrsqrt.pop %v453
        %v470 = vrsqrt.pop %v454
        %v471 = vrsqrt.pop %v455
        %v472 = vrsqrt.pop %v456
        %v473 = vrsqrt.pop %v457
        %v474 = vmul.f32 %v362, %v458
        %v475 = vmul.f32 %v363, %v459
        %v476 = vmul.f32 %v364, %v460
        %v477 = vmul.f32 %v365, %v461
        %v478 = vmul.f32 %v366, %v462
        %v479 = vmul.f32 %v367, %v463
        %v480 = vmul.f32 %v368, %v464
        %v481 = vmul.f32 %v369, %v465
        %v482 = vmul.f32 %v370, %v466
        %v483 = vmul.f32 %v371, %v467
        %v484 = vmul.f32 %v372, %v468
        %v485 = vmul.f32 %v373, %v469
        %v486 = vmul.f32 %v374, %v470
        %v487 = vmul.f32 %v375, %v471
        %v488 = vmul.f32 %v376, %v472
        %v489 = vmul.f32 %v377, %v473
        %v491 = vlaneseq
        %v492 = vshrl.u32 %v491, 7
        %v493 = vsub.s32 0, %v492
        %v494 = vrot.slane %v312, %v493
        %v496 = vmul.f32 %v474, %v494
        %v497 = vmul.f32 %v475, %v494
        %v498 = vmul.f32 %v476, %v494
        %v499 = vmul.f32 %v477, %v494
        %v500 = vmul.f32 %v478, %v494
        %v501 = vmul.f32 %v479, %v494
        %v502 = vmul.f32 %v480, %v494
        %v503 = vmul.f32 %v481, %v494
        %v504 = vmul.f32 %v482, %v494
        %v505 = vmul.f32 %v483, %v494
        %v506 = vmul.f32 %v484, %v494
        %v507 = vmul.f32 %v485, %v494
        %v508 = vmul.f32 %v486, %v494
        %v509 = vmul.f32 %v487, %v494
        %v510 = vmul.f32 %v488, %v494
        %v511 = vmul.f32 %v489, %v494
        %v513 = vlaneseq
        %v514 = vshrl.u32 %v513, 7
        %v515 = vsub.s32 0, %v514
        %v516 = vrot.slane %v313, %v515
        %v518 = vadd.f32 %v496, %v516
        %v519 = vadd.f32 %v497, %v516
        %v520 = vadd.f32 %v498, %v516
        %v521 = vadd.f32 %v499, %v516
        %v522 = vadd.f32 %v500, %v516
        %v523 = vadd.f32 %v501, %v516
        %v524 = vadd.f32 %v502, %v516
        %v525 = vadd.f32 %v503, %v516
        %v526 = vadd.f32 %v504, %v516
        %v527 = vadd.f32 %v505, %v516
        %v528 = vadd.f32 %v506, %v516
        %v529 = vadd.f32 %v507, %v516
        %v530 = vadd.f32 %v508, %v516
        %v531 = vadd.f32 %v509, %v516
        %v532 = vadd.f32 %v510, %v516
        %v533 = vadd.f32 %v511, %v516
        %v534 = vpack.c.bf16 %v519, %v518
        %v535 = vpack.c.bf16 %v521, %v520
        %v536 = vpack.c.bf16 %v523, %v522
        %v537 = vpack.c.bf16 %v525, %v524
        %v538 = vpack.c.bf16 %v527, %v526
        %v539 = vpack.c.bf16 %v529, %v528
        %v540 = vpack.c.bf16 %v531, %v530
        %v541 = vpack.c.bf16 %v533, %v532
        %v542 = vld [vmem:[#allocation5] sm:$0xf]
        %v543 = vld [vmem:[#allocation5 + $0x4] sm:$0xf]
        %v544 = vld [vmem:[#allocation5 + $0x8] sm:$0xf]
        %v545 = vld [vmem:[#allocation5 + $0xc] sm:$0xf]
        %v546 = vld [vmem:[#allocation5 + $0x10] sm:$0xf]
        %v547 = vld [vmem:[#allocation5 + $0x14] sm:$0xf]
        %v548 = vld [vmem:[#allocation5 + $0x18] sm:$0xf]
        %v549 = vld [vmem:[#allocation5 + $0x1c] sm:$0xf]
        %v550 = vld [vmem:[#allocation5 + $0x20] sm:$0xf]
        %v551 = vld [vmem:[#allocation5 + $0x24] sm:$0xf]
        %v552 = vld [vmem:[#allocation5 + $0x28] sm:$0xf]
        %v553 = vld [vmem:[#allocation5 + $0x2c] sm:$0xf]
        %v554 = vld [vmem:[#allocation5 + $0x30] sm:$0xf]
        %v555 = vld [vmem:[#allocation5 + $0x34] sm:$0xf]
        %v556 = vld [vmem:[#allocation5 + $0x38] sm:$0xf]
        %v557 = vld [vmem:[#allocation5 + $0x3c] sm:$0xf]
        %v558 = vld [vmem:[%s293] sm:$0x1]
        %v560 = vlaneseq
        %v561 = vshrl.u32 %v560, 7
        %v562 = vsub.s32 0, %v561
        %v563 = vrot.slane %v558, %v562
        %v581 = vunpack.c.l.b16 %v542
        %v582 = vunpack.c.l.b16 %v543
        %v583 = vunpack.c.l.b16 %v544
        %v584 = vunpack.c.l.b16 %v545
        %v585 = vunpack.c.l.b16 %v546
        %v586 = vunpack.c.l.b16 %v547
        %v587 = vunpack.c.l.b16 %v548
        %v588 = vunpack.c.l.b16 %v549
        %v589 = vunpack.c.l.b16 %v550
        %v590 = vunpack.c.l.b16 %v551
        %v591 = vunpack.c.l.b16 %v552
        %v592 = vunpack.c.l.b16 %v553
        %v593 = vunpack.c.l.b16 %v554
        %v594 = vunpack.c.l.b16 %v555
        %v595 = vunpack.c.l.b16 %v556
        %v596 = vunpack.c.l.b16 %v557
        %v597 = vpack.c.b16 %v582, %v581
        %v598 = vpack.c.b16 %v584, %v583
        %v599 = vpack.c.b16 %v586, %v585
        %v600 = vpack.c.b16 %v588, %v587
        %v601 = vpack.c.b16 %v590, %v589
        %v602 = vpack.c.b16 %v592, %v591
        %v603 = vpack.c.b16 %v594, %v593
        %v604 = vpack.c.b16 %v596, %v595
        %613 = vmatprep.subr.bf16.mxu0 0
        %614 = vmatpush1.bf16.msra.mxu0 %v604
        %615 = vmatprep.subr.bf16.mxu0 0
        %616 = vmatpush1.bf16.msra.mxu0 %v603
        %617 = vmatprep.subr.bf16.mxu0 0
        %618 = vmatpush1.bf16.msra.mxu0 %v602
        %619 = vmatprep.subr.bf16.mxu0 0
        %620 = vmatpush1.bf16.msra.mxu0 %v601
        %621 = vmatprep.subr.bf16.mxu0 0
        %622 = vmatpush1.bf16.msra.mxu0 %v600
        %623 = vmatprep.subr.bf16.mxu0 0
        %624 = vmatpush1.bf16.msra.mxu0 %v599
        %625 = vmatprep.subr.bf16.mxu0 0
        %626 = vmatpush1.bf16.msra.mxu0 %v598
        %627 = vmatprep.subr.bf16.mxu0 0
        %628 = vmatpush1.bf16.msra.mxu0 %v597
        %629 = vmatprep.subr.bf16.mxu0 0
        %630 = vmatpush2.bf16.msra.mxu0 0
        %631 = vmatprep.subr.bf16.mxu0 0
        %632 = vmatpush2.bf16.msra.mxu0 0
        %633 = vmatprep.subr.bf16.mxu0 0
        %634 = vmatpush2.bf16.msra.mxu0 0
        %635 = vmatprep.subr.bf16.mxu0 0
        %636 = vmatpush2.bf16.msra.mxu0 0
        %637 = vmatprep.subr.bf16.mxu0 0
        %638 = vmatpush2.bf16.msra.mxu0 0
        %639 = vmatprep.subr.bf16.mxu0 0
        %640 = vmatpush2.bf16.msra.mxu0 0
        %641 = vmatprep.subr.bf16.mxu0 0
        %642 = vmatpush2.bf16.msra.mxu0 0
        %643 = vmatprep.subr.bf16.mxu0 0
        %644 = vmatpush2.bf16.msra.mxu0 0
        %645 = vmatprep.mubr.bf16.mxu0 0
        %646 = vmatmul.mubr.bf16.gmra.mxu0 %v534
        %v647 = vpop.f32.mrf.mxu0
        %v648 = vadd.f32 %v563, %v647
        %v649 = vpop.f32.mrf.mxu0
        %v650 = vpop.f32.mrf.mxu0
        %v651 = vadd.f32 %v563, %v650
        %v652 = vpop.f32.mrf.mxu0
        %653 = vmatprep.mubr.bf16.mxu0 0
        %654 = vmatmul.mubr.bf16.gmra.mxu0 %v535
        %v655 = vpop.f32.mrf.mxu0
        %v656 = vadd.f32 %v563, %v655
        %v657 = vpop.f32.mrf.mxu0
        %v658 = vpop.f32.mrf.mxu0
        %v659 = vadd.f32 %v563, %v658
        %v660 = vpop.f32.mrf.mxu0
        %661 = vmatprep.mubr.bf16.mxu0 0
        %662 = vmatmul.mubr.bf16.gmra.mxu0 %v536
        %v663 = vpop.f32.mrf.mxu0
        %v664 = vadd.f32 %v563, %v663
        %v665 = vpop.f32.mrf.mxu0
        %v666 = vpop.f32.mrf.mxu0
        %v667 = vadd.f32 %v563, %v666
        %v668 = vpop.f32.mrf.mxu0
        %669 = vmatprep.mubr.bf16.mxu0 0
        %670 = vmatmul.mubr.bf16.gmra.mxu0 %v537
        %v671 = vpop.f32.mrf.mxu0
        %v672 = vadd.f32 %v563, %v671
        %v673 = vpop.f32.mrf.mxu0
        %v674 = vpop.f32.mrf.mxu0
        %v675 = vadd.f32 %v563, %v674
        %v676 = vpop.f32.mrf.mxu0
        %677 = vmatprep.mubr.bf16.mxu0 0
        %678 = vmatmul.mubr.bf16.gmra.mxu0 %v538
        %v679 = vpop.f32.mrf.mxu0
        %v680 = vadd.f32 %v563, %v679
        %v681 = vpop.f32.mrf.mxu0
        %v682 = vpop.f32.mrf.mxu0
        %v683 = vadd.f32 %v563, %v682
        %v684 = vpop.f32.mrf.mxu0
        %685 = vmatprep.mubr.bf16.mxu0 0
        %686 = vmatmul.mubr.bf16.gmra.mxu0 %v539
        %v687 = vpop.f32.mrf.mxu0
        %v688 = vadd.f32 %v563, %v687
        %v689 = vpop.f32.mrf.mxu0
        %v690 = vpop.f32.mrf.mxu0
        %v691 = vadd.f32 %v563, %v690
        %v692 = vpop.f32.mrf.mxu0
        %693 = vmatprep.mubr.bf16.mxu0 0
        %694 = vmatmul.mubr.bf16.gmra.mxu0 %v540
        %v695 = vpop.f32.mrf.mxu0
        %v696 = vadd.f32 %v563, %v695
        %v697 = vpop.f32.mrf.mxu0
        %v698 = vpop.f32.mrf.mxu0
        %v699 = vadd.f32 %v563, %v698
        %v700 = vpop.f32.mrf.mxu0
        %701 = vmatprep.mubr.bf16.mxu0 0
        %702 = vmatmul.mubr.bf16.gmra.mxu0 %v541
        %v703 = vpop.f32.mrf.mxu0
        %v704 = vadd.f32 %v563, %v703
        %v705 = vpop.f32.mrf.mxu0
        %v706 = vpop.f32.mrf.mxu0
        %v707 = vadd.f32 %v563, %v706
        %v708 = vpop.f32.mrf.mxu0
        %709 = vdwg.mxu0
        %710 = vst [vmem:[%s289] sm:$0xff] %v648
        %711 = vst [vmem:[%s289 + $0x8] sm:$0xff] %v651
        %712 = vst [vmem:[%s289 + $0x10] sm:$0xff] %v656
        %713 = vst [vmem:[%s289 + $0x18] sm:$0xff] %v659
        %714 = vst [vmem:[%s289 + $0x20] sm:$0xff] %v664
        %715 = vst [vmem:[%s289 + $0x28] sm:$0xff] %v667
        %716 = vst [vmem:[%s289 + $0x30] sm:$0xff] %v672
        %717 = vst [vmem:[%s289 + $0x38] sm:$0xff] %v675
        %718 = vst [vmem:[%s289 + $0x40] sm:$0xff] %v680
        %719 = vst [vmem:[%s289 + $0x48] sm:$0xff] %v683
        %720 = vst [vmem:[%s289 + $0x50] sm:$0xff] %v688
        %721 = vst [vmem:[%s289 + $0x58] sm:$0xff] %v691
        %722 = vst [vmem:[%s289 + $0x60] sm:$0xff] %v696
        %723 = vst [vmem:[%s289 + $0x68] sm:$0xff] %v699
        %724 = vst [vmem:[%s289 + $0x70] sm:$0xff] %v704
        %725 = vst [vmem:[%s289 + $0x78] sm:$0xff] %v707
        %s726 = sand.u32 %s165, 1
        %s727 = scalar_lea.sflag [#allocation4], %s726
        %s728 = sand.u32 %s165, 1
        %s729 = smul.addr %s728, 128
        %s730 = scalar_lea.vmem [#allocation7], %s729
        // Predicated region
        $region49: #{tpu_custom_call.1} parent=39 // pred_check
          %p731 = pneg %p175
        $region50: #{tpu_custom_call.1} parent=39 // pred_check_branch
          %733 = sbr.rel (%p731) target = $region52
        $region51: #{tpu_custom_call.1} parent=39 // pred_region
          %s734 = smul.u32 16, %s27
          %s736 = ssub.s32 2048, 2048
          %737 = vsyncadd %s727, %s736
          %s738 = sadd.s32 %s28, %s734
          %s739 = smul.addr %s738, 128
          %s740 = scalar_lea.hbm %s5, %s739
          %s741 = sshll.u32 %s730, 4
          %s742 = int_to_ptr.vmem [resolvable:$true] %s741
          %747 = dma.vmem_to_hbm [thread:$0]  %s742, 2048, %s740, %s727, 128, 128, 8
        $region52: #{tpu_custom_call.1} parent=39 // pred_fallthru
          _
      $region40: #{tpu_custom_call.1} parent=5 // pred_fallthru
        _
      %p748 = scmp.le.s32.totalorder 2, %s18
      // Predicated region
      $region53: #{tpu_custom_call.1} parent=5 // pred_check
        %p749 = pneg %p748
      $region54: #{tpu_custom_call.1} parent=5 // pred_check_branch
        %751 = sbr.rel (%p749) target = $region56
      $region55: #{tpu_custom_call.1} parent=5 // pred_region
        %s752 = ssub.s32 %s18, 2
        // Predicated region
        $region57: #{tpu_custom_call.1} parent=55 // pred_check
          %p753 = pneg %p181
        $region58: #{tpu_custom_call.1} parent=55 // pred_check_branch
          %755 = sbr.rel (%p753) target = $region60
        $region59: #{tpu_custom_call.1} parent=55 // pred_region
          %s756 = sand.u32 %s166, 1
          %s757 = scalar_lea.sflag [#allocation4], %s756
          %s758 = sand.u32 %s166, 1
          %s759 = smul.addr %s758, 128
          %s760 = scalar_lea.vmem [#allocation7], %s759
          %761 = dma.done %s757, 2048
        $region60: #{tpu_custom_call.1} parent=55 // pred_fallthru
          _
      $region56: #{tpu_custom_call.1} parent=5 // pred_fallthru
        _
    $region6: #{tpu_custom_call.1} parent=1 // loop_footer
      %s22 = sadd.s32 1, %s18
    $region7: #{tpu_custom_call.1} parent=1 // loop_footer_branch
      %17 = sbr.rel target = $region3
    $region8: #{tpu_custom_call.1} parent=1 // loop_exit
      _
    %762 = vsyncpa [#allocation3], 1
    %s763 = scalar_lea.sflag [#allocation3], 1
    %764 = vsyncpa %s763, 1
    %765 = vsyncpa [#allocation6], 1
    %766 = vsyncpa [#allocation4], 1
    %s767 = scalar_lea.sflag [#allocation4], 1
    %768 = vsyncpa %s767, 1

// kernel: tpu_custom_call.1
$region0: #{tpu_custom_call.1}
  #allocation0 [shape = 'u32[]', space=smem, size = 0x4, offset = 0x4, fixed_abs, tag = 'smem constant byte address 0x4 - core index']
  #allocation1 [shape = 'u32[144,128]{1,0:T(1,128)}', space=vmem, size = 0x12000, scoped, tag = 'internal scratch']
  %s0 = inlined_call_operand.hbm [shape: f32[256,128], index: 0, kind: input, shape index: {}]
  %s1 = inlined_call_operand.vmem [shape: f32[1,128], index: 1, kind: input, shape index: {}]
  %s2 = inlined_call_operand.vmem [shape: f32[1,128], index: 2, kind: input, shape index: {}]
  %s3 = inlined_call_operand.hbm [shape: bf16[128,128], index: 3, kind: input, shape index: {}]
  %s4 = inlined_call_operand.vmem [shape: f32[1,128], index: 4, kind: input, shape index: {}]
  %s5 = inlined_call_operand.hbm [shape: f32[256,128], index: 5, kind: output, shape index: {}]
  %s6 = sld [smem:[#allocation0]]
  $region61: #{tpu_custom_call.1} parent=0
    _
  %s8 = ssub.s32 1, %s6
  %s9 = scalar_select 0, %s8, %s6
  $region1: #{tpu_custom_call.1} parent=0
    #allocation2 [shape = 'u8[131072]{0}', space=vmem, size = 0x20000, scoped, tag = 'input window, operand 0']
    #allocation3 [shape = 's32[2]{0}', space=sflag, size = 0x8, scoped, tag = 'scoped memory for tpu_custom_call.1']
    #allocation4 [shape = 's32[2]{0}', space=sflag, size = 0x8, scoped, tag = 'scoped memory for tpu_custom_call.1']
    #allocation5 [shape = 'u8[32768]{0}', space=vmem, size = 0x8000, scoped, tag = 'input window, operand 3, single buffered']
    #allocation6 [shape = 's32[1]{0}', space=sflag, size = 0x4, scoped, tag = 'scoped memory for tpu_custom_call.1']
    #allocation7 [shape = 'u8[131072]{0}', space=vmem, size = 0x20000, scoped, tag = 'output window, operand 0']
    %10 = vsyncpa [#allocation3], 0
    %s11 = scalar_lea.sflag [#allocation3], 1
    %12 = vsyncpa %s11, 0
    %13 = vsyncpa [#allocation6], 0
    %14 = vsyncpa [#allocation4], 0
    %s15 = scalar_lea.sflag [#allocation4], 1
    %16 = vsyncpa %s15, 0
    loop: start=0, step=1, limit=4
    $region2: #{tpu_custom_call.1} parent=1 // loop_pre_header
      _
    $region3: #{tpu_custom_call.1} parent=1 // loop_header
      %s18 = sphi 0, %s22
      %p19 = scmp.ge.s32.totalorder %s18, 4
      %s25 = sphi 0, %s37
      %s26 = sphi 0, %s33
      %s27 = sphi 0, %s25
      %s28 = sphi 0, %s26
      %s29 = sphi 0, %s27
      %s30 = sphi 0, %s28
      %s40 = sphi 0, %s42
      %s43 = sphi 0, %s40
      %s44 = sphi 0, %s43
      %s60 = sphi 0, %s44
      %s64 = sphi 0, %s64
      %s66 = sphi 0, %s64
      %s67 = sphi 0, %s66
      %s81 = sphi 0, %s67
      %s85 = sphi 0, %s85
      %s87 = sphi 0, %s85
      %s88 = sphi 0, %s87
      %s102 = sphi 0, %s88
      %s108 = sphi 0, %s110
      %s111 = sphi 0, %s108
      %s112 = sphi 0, %s111
      %s128 = sphi 0, %s112
      %s134 = sphi 0, %s136
      %s137 = sphi 0, %s134
      %s138 = sphi 0, %s137
      %s154 = sphi 0, %s138
      %s162 = sphi 0, %s164
      %s165 = sphi 0, %s162
      %s166 = sphi 0, %s165
      %s182 = sphi 0, %s166
    $region4: #{tpu_custom_call.1} parent=1 // loop_header_branch
      %21 = sbr.rel (%p19) target = $region8
    $region5: #{tpu_custom_call.1} parent=1 // loop_body
      %s23 = ssub.s32 %s18, 1
      %s24 = ssub.s32 %s18, 2
      %s31 = sadd.s32 1, %s26
      %p32 = scmp.ge.s32.totalorder %s31, 1
      %s33 = scalar_select %p32, 0, %s31
      %s34 = sadd.s32 1, %s25
      %s35 = scalar_select %p32, %s34, %s25
      %p36 = scmp.ge.s32.totalorder %s35, 2
      %s37 = scalar_select %p36, 0, %s35
      %s38 = ssub.s32 %s25, %s37
      %p39 = scmp.eq.s32.totalorder %s38, 0
      %s41 = sadd.s32 %s40, 1
      %s42 = scalar_select %p39, %s40, %s41
      %p45 = pneg %p39
      %p46 = scmp.eq.s32.totalorder %s18, 1
      %p47 = por %p45, %p46
      %p48 = scmp.ne.s32.totalorder %s40, %s43
      %p49 = scmp.eq.s32.totalorder %s18, 0
      %p50 = por %p48, %p49
      %p51 = scmp.ne.s32.totalorder %s40, %s43
      %p52 = scmp.eq.s32.totalorder %s23, 1
      %p53 = por %p51, %p52
      %p54 = scmp.ne.s32.totalorder %s43, %s44
      %p55 = scmp.eq.s32.totalorder %s23, 0
      %p56 = por %p54, %p55
      %p57 = scmp.ne.s32.totalorder %s43, %s44
      %p58 = scmp.eq.s32.totalorder %s24, 1
      %p59 = por %p57, %p58
      %p61 = scmp.ne.s32.totalorder %s44, %s60
      %p62 = scmp.eq.s32.totalorder %s24, 0
      %p63 = por %p61, %p62
      %s65 = sadd.s32 %s64, 1
      %p68 = scmp.eq.s32.totalorder %s18, 1
      %p69 = scmp.ne.s32.totalorder %s64, %s66
      %p70 = scmp.eq.s32.totalorder %s18, 0
      %p71 = por %p69, %p70
      %p72 = scmp.ne.s32.totalorder %s64, %s66
      %p73 = scmp.eq.s32.totalorder %s23, 1
      %p74 = por %p72, %p73
      %p75 = scmp.ne.s32.totalorder %s66, %s67
      %p76 = scmp.eq.s32.totalorder %s23, 0
      %p77 = por %p75, %p76
      %p78 = scmp.ne.s32.totalorder %s66, %s67
      %p79 = scmp.eq.s32.totalorder %s24, 1
      %p80 = por %p78, %p79
      %p82 = scmp.ne.s32.totalorder %s67, %s81
      %p83 = scmp.eq.s32.totalorder %s24, 0
      %p84 = por %p82, %p83
      %s86 = sadd.s32 %s85, 1
      %p89 = scmp.eq.s32.totalorder %s18, 1
      %p90 = scmp.ne.s32.totalorder %s85, %s87
      %p91 = scmp.eq.s32.totalorder %s18, 0
      %p92 = por %p90, %p91
      %p93 = scmp.ne.s32.totalorder %s85, %s87
      %p94 = scmp.eq.s32.totalorder %s23, 1
      %p95 = por %p93, %p94
      %p96 = scmp.ne.s32.totalorder %s87, %s88
      %p97 = scmp.eq.s32.totalorder %s23, 0
      %p98 = por %p96, %p97
      %p99 = scmp.ne.s32.totalorder %s87, %s88
      %p100 = scmp.eq.s32.totalorder %s24, 1
      %p101 = por %p99, %p100
      %p103 = scmp.ne.s32.totalorder %s88, %s102
      %p104 = scmp.eq.s32.totalorder %s24, 0
      %p105 = por %p103, %p104
      %s106 = ssub.s32 %s26, %s33
      %p107 = scmp.eq.s32.totalorder %s106, 0
      %s109 = sadd.s32 %s108, 1
      %s110 = scalar_select %p107, %s108, %s109
      %p113 = pneg %p107
      %p114 = scmp.eq.s32.totalorder %s18, 1
      %p115 = por %p113, %p114
      %p116 = scmp.ne.s32.totalorder %s108, %s111
      %p117 = scmp.eq.s32.totalorder %s18, 0
      %p118 = por %p116, %p117
      %p119 = scmp.ne.s32.totalorder %s108, %s111
      %p120 = scmp.eq.s32.totalorder %s23, 1
      %p121 = por %p119, %p120
      %p122 = scmp.ne.s32.totalorder %s111, %s112
      %p123 = scmp.eq.s32.totalorder %s23, 0
      %p124 = por %p122, %p123
      %p125 = scmp.ne.s32.totalorder %s111, %s112
      %p126 = scmp.eq.s32.totalorder %s24, 1
      %p127 = por %p125, %p126
      %p129 = scmp.ne.s32.totalorder %s112, %s128
      %p130 = scmp.eq.s32.totalorder %s24, 0
      %p131 = por %p129, %p130
      %s132 = ssub.s32 %s26, %s33
      %p133 = scmp.eq.s32.totalorder %s132, 0
      %s135 = sadd.s32 %s134, 1
      %s136 = scalar_select %p133, %s134, %s135
      %p139 = pneg %p133
      %p140 = scmp.eq.s32.totalorder %s18, 1
      %p141 = por %p139, %p140
      %p142 = scmp.ne.s32.totalorder %s134, %s137
      %p143 = scmp.eq.s32.totalorder %s18, 0
      %p144 = por %p142, %p143
      %p145 = scmp.ne.s32.totalorder %s134, %s137
      %p146 = scmp.eq.s32.totalorder %s23, 1
      %p147 = por %p145, %p146
      %p148 = scmp.ne.s32.totalorder %s137, %s138
      %p149 = scmp.eq.s32.totalorder %s23, 0
      %p150 = por %p148, %p149
      %p151 = scmp.ne.s32.totalorder %s137, %s138
      %p152 = scmp.eq.s32.totalorder %s24, 1
      %p153 = por %p151, %p152
      %p155 = scmp.ne.s32.totalorder %s138, %s154
      %p156 = scmp.eq.s32.totalorder %s24, 0
      %p157 = por %p155, %p156
      %s158 = ssub.s32 %s25, %s37
      %s159 = ssub.s32 %s26, %s33
      %s160 = sor.u32 %s158, %s159
      %p161 = scmp.eq.s32.totalorder %s160, 0
      %s163 = sadd.s32 %s162, 1
      %s164 = scalar_select %p161, %s162, %s163
      %p167 = pneg %p161
      %p168 = scmp.eq.s32.totalorder %s18, 1
      %p169 = por %p167, %p168
      %p170 = scmp.ne.s32.totalorder %s162, %s165
      %p171 = scmp.eq.s32.totalorder %s18, 0
      %p172 = por %p170, %p171
      %p173 = scmp.ne.s32.totalorder %s162, %s165
      %p174 = scmp.eq.s32.totalorder %s23, 1
      %p175 = por %p173, %p174
      %p176 = scmp.ne.s32.totalorder %s165, %s166
      %p177 = scmp.eq.s32.totalorder %s23, 0
      %p178 = por %p176, %p177
      %p179 = scmp.ne.s32.totalorder %s165, %s166
      %p180 = scmp.eq.s32.totalorder %s24, 1
      %p181 = por %p179, %p180
      %p183 = scmp.ne.s32.totalorder %s166, %s182
      %p184 = scmp.eq.s32.totalorder %s24, 0
      %p185 = por %p183, %p184
      %p186 = scmp.le.s32.totalorder 1, %s18
      %p187 = scmp.lt.s32.totalorder %s18, 3
      %p188 = pnand %p186, %p187
      %p189 = pneg %p188
      // Predicated region
      $region9: #{tpu_custom_call.1} parent=5 // pred_check
        _
      $region10: #{tpu_custom_call.1} parent=5 // pred_check_branch
        %191 = sbr.rel (%p188) target = $region12
      $region11: #{tpu_custom_call.1} parent=5 // pred_region
        %s192 = ssub.s32 %s18, 1
        // Predicated region
        $region13: #{tpu_custom_call.1} parent=11 // pred_check
          %p193 = pneg %p77
        $region14: #{tpu_custom_call.1} parent=11 // pred_check_branch
          %195 = sbr.rel (%p193) target = $region16
        $region15: #{tpu_custom_call.1} parent=11 // pred_region
          _
        $region16: #{tpu_custom_call.1} parent=11 // pred_fallthru
          _
        // Predicated region
        $region17: #{tpu_custom_call.1} parent=11 // pred_check
          %p196 = pneg %p98
        $region18: #{tpu_custom_call.1} parent=11 // pred_check_branch
          %198 = sbr.rel (%p196) target = $region20
        $region19: #{tpu_custom_call.1} parent=11 // pred_region
          _
        $region20: #{tpu_custom_call.1} parent=11 // pred_fallthru
          _
        // Predicated region
        $region21: #{tpu_custom_call.1} parent=11 // pred_check
          %p199 = pneg %p124
        $region22: #{tpu_custom_call.1} parent=11 // pred_check_branch
          %201 = sbr.rel (%p199) target = $region24
        $region23: #{tpu_custom_call.1} parent=11 // pred_region
          %s203 = ssub.s32 1024, 1024
          %204 = vsyncadd [#allocation6], %s203
          %s205 = smul.addr %s28, 64
          %s206 = scalar_lea.hbm %s3, %s205
          %s207 = sshll.u32 [#allocation5], 4
          %s208 = int_to_ptr.vmem [resolvable:$true] %s207
          %213 = dma.hbm_to_vmem [thread:$0]  %s206, 1024, %s208, [#allocation6], 64, 64, 4
        $region24: #{tpu_custom_call.1} parent=11 // pred_fallthru
          _
        // Predicated region
        $region25: #{tpu_custom_call.1} parent=11 // pred_check
          %p214 = pneg %p150
        $region26: #{tpu_custom_call.1} parent=11 // pred_check_branch
          %216 = sbr.rel (%p214) target = $region28
        $region27: #{tpu_custom_call.1} parent=11 // pred_region
          %p217 = scmp.lt.s32.totalorder %s28, 0
          %s218 = scalar_select %p217, %s28, 0
          %s219 = scalar_lea.vmem %s4, %s218
        $region28: #{tpu_custom_call.1} parent=11 // pred_fallthru
          _
      $region12: #{tpu_custom_call.1} parent=5 // pred_fallthru
        _
      %p220 = scmp.lt.s32.totalorder %s18, 2
      // Predicated region
      $region29: #{tpu_custom_call.1} parent=5 // pred_check
        %p221 = pneg %p220
      $region30: #{tpu_custom_call.1} parent=5 // pred_check_branch
        %223 = sbr.rel (%p221) target = $region32
      $region31: #{tpu_custom_call.1} parent=5 // pred_region
        // Predicated region
        $region33: #{tpu_custom_call.1} parent=31 // pred_check
          %p224 = pneg %p50
        $region34: #{tpu_custom_call.1} parent=31 // pred_check_branch
          %226 = sbr.rel (%p224) target = $region36
        $region35: #{tpu_custom_call.1} parent=31 // pred_region
          %s227 = sand.u32 %s40, 1
          %s228 = scalar_lea.sflag [#allocation3], %s227
          %s229 = sand.u32 %s40, 1
          %s230 = smul.addr %s229, 128
          %s231 = scalar_lea.vmem [#allocation2], %s230
          %s232 = smul.u32 16, %s25
          %s234 = ssub.s32 2048, 2048
          %235 = vsyncadd %s228, %s234
          %s236 = smul.addr %s232, 128
          %s237 = scalar_lea.hbm %s0, %s236
          %s238 = sshll.u32 %s231, 4
          %s239 = int_to_ptr.vmem [resolvable:$true] %s238
          %244 = dma.hbm_to_vmem [thread:$0]  %s237, 2048, %s239, %s228, 128, 128, 8
        $region36: #{tpu_custom_call.1} parent=31 // pred_fallthru
          _
      $region32: #{tpu_custom_call.1} parent=5 // pred_fallthru
        _
      %p245 = scmp.le.s32.totalorder 1, %s18
      %p246 = scmp.lt.s32.totalorder %s18, 3
      %p247 = pnand %p245, %p246
      %p248 = pneg %p247
      // Predicated region
      $region37: #{tpu_custom_call.1} parent=5 // pred_check
        _
      $region38: #{tpu_custom_call.1} parent=5 // pred_check_branch
        %250 = sbr.rel (%p247) target = $region40
      $region39: #{tpu_custom_call.1} parent=5 // pred_region
        %s251 = ssub.s32 %s18, 1
        %s252 = sand.u32 %s43, 1
        %s253 = scalar_lea.sflag [#allocation3], %s252
        %s254 = sand.u32 %s43, 1
        %s255 = smul.addr %s254, 128
        %s256 = scalar_lea.vmem [#allocation2], %s255
        // Predicated region
        $region41: #{tpu_custom_call.1} parent=39 // pred_check
          %p257 = pneg %p56
        $region42: #{tpu_custom_call.1} parent=39 // pred_check_branch
          %259 = sbr.rel (%p257) target = $region44
        $region43: #{tpu_custom_call.1} parent=39 // pred_region
          %260 = dma.done %s253, 2048
        $region44: #{tpu_custom_call.1} parent=39 // pred_fallthru
          _
        // Predicated region
        $region45: #{tpu_custom_call.1} parent=39 // pred_check
          %p261 = pneg %p124
        $region46: #{tpu_custom_call.1} parent=39 // pred_check_branch
          %263 = sbr.rel (%p261) target = $region48
        $region47: #{tpu_custom_call.1} parent=39 // pred_region
          %264 = dma.done [#allocation6], 1024
        $region48: #{tpu_custom_call.1} parent=39 // pred_fallthru
          _
        %s265 = sand.u32 %s43, 1
        %s266 = scalar_lea.sflag [#allocation3], %s265
        %s267 = sand.u32 %s43, 1
        %s268 = smul.addr %s267, 128
        %s269 = scalar_lea.vmem [#allocation2], %s268
        %p270 = pneg %p56
        %p271 = pneg %p53
        %p272 = pneg %p77
        %p273 = pneg %p74
        %p274 = pneg %p98
        %p275 = pneg %p95
        %p276 = pneg %p124
        %p277 = pneg %p121
        %p278 = scmp.lt.s32.totalorder %s28, 0
        %s279 = scalar_select %p278, %s28, 0
        %s280 = scalar_lea.vmem %s4, %s279
        %p281 = pneg %p150
        %p282 = pneg %p147
        %p283 = pneg %p178
        %p284 = pneg %p175
        %s285 = sand.u32 %s165, 1
        %s286 = scalar_lea.sflag [#allocation4], %s285
        %s287 = sand.u32 %s165, 1
        %s288 = smul.addr %s287, 128
        %s289 = scalar_lea.vmem [#allocation7], %s288
        %s290 = smul.u32 16, %s27
        %p291 = scmp.lt.s32.totalorder %s28, 0
        %s292 = scalar_select %p291, %s28, 0
        %s293 = scalar_lea.vmem %s4, %s292
        %s294 = smul.u32 16, %s27
        %v296 = vld [vmem:[%s256] sm:$0xff]
        %v297 = vld [vmem:[%s256 + $0x8] sm:$0xff]
        %v298 = vld [vmem:[%s256 + $0x10] sm:$0xff]
        %v299 = vld [vmem:[%s256 + $0x18] sm:$0xff]
        %v300 = vld [vmem:[%s256 + $0x20] sm:$0xff]
        %v301 = vld [vmem:[%s256 + $0x28] sm:$0xff]
        %v302 = vld [vmem:[%s256 + $0x30] sm:$0xff]
        %v303 = vld [vmem:[%s256 + $0x38] sm:$0xff]
        %v304 = vld [vmem:[%s256 + $0x40] sm:$0xff]
        %v305 = vld [vmem:[%s256 + $0x48] sm:$0xff]
        %v306 = vld [vmem:[%s256 + $0x50] sm:$0xff]
        %v307 = vld [vmem:[%s256 + $0x58] sm:$0xff]
        %v308 = vld [vmem:[%s256 + $0x60] sm:$0xff]
        %v309 = vld [vmem:[%s256 + $0x68] sm:$0xff]
        %v310 = vld [vmem:[%s256 + $0x70] sm:$0xff]
        %v311 = vld [vmem:[%s256 + $0x78] sm:$0xff]
        %v312 = vld [vmem:[%s1] sm:$0x1]
        %v313 = vld [vmem:[%s2] sm:$0x1]
        %314 = vadd.xlane.f32.xlu0 %v296
        %v315 = vpop.xlane.xlu0 %314
        %316 = vadd.xlane.f32.xlu0 %v297
        %v317 = vpop.xlane.xlu0 %316
        %318 = vadd.xlane.f32.xlu0 %v298
        %v319 = vpop.xlane.xlu0 %318
        %320 = vadd.xlane.f32.xlu0 %v299
        %v321 = vpop.xlane.xlu0 %320
        %322 = vadd.xlane.f32.xlu0 %v300
        %v323 = vpop.xlane.xlu0 %322
        %324 = vadd.xlane.f32.xlu0 %v301
        %v325 = vpop.xlane.xlu0 %324
        %326 = vadd.xlane.f32.xlu0 %v302
        %v327 = vpop.xlane.xlu0 %326
        %328 = vadd.xlane.f32.xlu0 %v303
        %v329 = vpop.xlane.xlu0 %328
        %330 = vadd.xlane.f32.xlu0 %v304
        %v331 = vpop.xlane.xlu0 %330
        %332 = vadd.xlane.f32.xlu0 %v305
        %v333 = vpop.xlane.xlu0 %332
        %334 = vadd.xlane.f32.xlu0 %v306
        %v335 = vpop.xlane.xlu0 %334
        %336 = vadd.xlane.f32.xlu0 %v307
        %v337 = vpop.xlane.xlu0 %336
        %338 = vadd.xlane.f32.xlu0 %v308
        %v339 = vpop.xlane.xlu0 %338
        %340 = vadd.xlane.f32.xlu0 %v309
        %v341 = vpop.xlane.xlu0 %340
        %342 = vadd.xlane.f32.xlu0 %v310
        %v343 = vpop.xlane.xlu0 %342
        %344 = vadd.xlane.f32.xlu0 %v311
        %v345 = vpop.xlane.xlu0 %344
        %v346 = vmul.f32 %v315, 0.0078125
        %v347 = vmul.f32 %v317, 0.0078125
        %v348 = vmul.f32 %v319, 0.0078125
        %v349 = vmul.f32 %v321, 0.0078125
        %v350 = vmul.f32 %v323, 0.0078125
        %v351 = vmul.f32 %v325, 0.0078125
        %v352 = vmul.f32 %v327, 0.0078125
        %v353 = vmul.f32 %v329, 0.0078125
        %v354 = vmul.f32 %v331, 0.0078125
        %v355 = vmul.f32 %v333, 0.0078125
        %v356 = vmul.f32 %v335, 0.0078125
        %v357 = vmul.f32 %v337, 0.0078125
        %v358 = vmul.f32 %v339, 0.0078125
        %v359 = vmul.f32 %v341, 0.0078125
        %v360 = vmul.f32 %v343, 0.0078125
        %v361 = vmul.f32 %v345, 0.0078125
        %v362 = vsub.f32 %v296, %v346
        %v363 = vsub.f32 %v297, %v347
        %v364 = vsub.f32 %v298, %v348
        %v365 = vsub.f32 %v299, %v349
        %v366 = vsub.f32 %v300, %v350
        %v367 = vsub.f32 %v301, %v351
        %v368 = vsub.f32 %v302, %v352
        %v369 = vsub.f32 %v303, %v353
        %v370 = vsub.f32 %v304, %v354
        %v371 = vsub.f32 %v305, %v355
        %v372 = vsub.f32 %v306, %v356
        %v373 = vsub.f32 %v307, %v357
        %v374 = vsub.f32 %v308, %v358
        %v375 = vsub.f32 %v309, %v359
        %v376 = vsub.f32 %v310, %v360
        %v377 = vsub.f32 %v311, %v361
        %v378 = vmul.f32 %v362, %v362
        %v379 = vmul.f32 %v363, %v363
        %v380 = vmul.f32 %v364, %v364
        %v381 = vmul.f32 %v365, %v365
        %v382 = vmul.f32 %v366, %v366
        %v383 = vmul.f32 %v367, %v367
        %v384 = vmul.f32 %v368, %v368
        %v385 = vmul.f32 %v369, %v369
        %v386 = vmul.f32 %v370, %v370
        %v387 = vmul.f32 %v371, %v371
        %v388 = vmul.f32 %v372, %v372
        %v389 = vmul.f32 %v373, %v373
        %v390 = vmul.f32 %v374, %v374
        %v391 = vmul.f32 %v375, %v375
        %v392 = vmul.f32 %v376, %v376
        %v393 = vmul.f32 %v377, %v377
        %394 = vadd.xlane.f32.xlu0 %v378
        %v395 = vpop.xlane.xlu0 %394
        %396 = vadd.xlane.f32.xlu0 %v379
        %v397 = vpop.xlane.xlu0 %396
        %398 = vadd.xlane.f32.xlu0 %v380
        %v399 = vpop.xlane.xlu0 %398
        %400 = vadd.xlane.f32.xlu0 %v381
        %v401 = vpop.xlane.xlu0 %400
        %402 = vadd.xlane.f32.xlu0 %v382
        %v403 = vpop.xlane.xlu0 %402
        %404 = vadd.xlane.f32.xlu0 %v383
        %v405 = vpop.xlane.xlu0 %404
        %406 = vadd.xlane.f32.xlu0 %v384
        %v407 = vpop.xlane.xlu0 %406
        %408 = vadd.xlane.f32.xlu0 %v385
        %v409 = vpop.xlane.xlu0 %408
        %410 = vadd.xlane.f32.xlu0 %v386
        %v411 = vpop.xlane.xlu0 %410
        %412 = vadd.xlane.f32.xlu0 %v387
        %v413 = vpop.xlane.xlu0 %412
        %414 = vadd.xlane.f32.xlu0 %v388
        %v415 = vpop.xlane.xlu0 %414
        %416 = vadd.xlane.f32.xlu0 %v389
        %v417 = vpop.xlane.xlu0 %416
        %418 = vadd.xlane.f32.xlu0 %v390
        %v419 = vpop.xlane.xlu0 %418
        %420 = vadd.xlane.f32.xlu0 %v391
        %v421 = vpop.xlane.xlu0 %420
        %422 = vadd.xlane.f32.xlu0 %v392
        %v423 = vpop.xlane.xlu0 %422
        %424 = vadd.xlane.f32.xlu0 %v393
        %v425 = vpop.xlane.xlu0 %424
        %v426 = vmul.f32 %v395, 0.0078125
        %v427 = vmul.f32 %v397, 0.0078125
        %v428 = vmul.f32 %v399, 0.0078125
        %v429 = vmul.f32 %v401, 0.0078125
        %v430 = vmul.f32 %v403, 0.0078125
        %v431 = vmul.f32 %v405, 0.0078125
        %v432 = vmul.f32 %v407, 0.0078125
        %v433 = vmul.f32 %v409, 0.0078125
        %v434 = vmul.f32 %v411, 0.0078125
        %v435 = vmul.f32 %v413, 0.0078125
        %v436 = vmul.f32 %v415, 0.0078125
        %v437 = vmul.f32 %v417, 0.0078125
        %v438 = vmul.f32 %v419, 0.0078125
        %v439 = vmul.f32 %v421, 0.0078125
        %v440 = vmul.f32 %v423, 0.0078125
        %v441 = vmul.f32 %v425, 0.0078125
        %v442 = vadd.f32 %v426, 1e-05
        %v443 = vadd.f32 %v427, 1e-05
        %v444 = vadd.f32 %v428, 1e-05
        %v445 = vadd.f32 %v429, 1e-05
        %v446 = vadd.f32 %v430, 1e-05
        %v447 = vadd.f32 %v431, 1e-05
        %v448 = vadd.f32 %v432, 1e-05
        %v449 = vadd.f32 %v433, 1e-05
        %v450 = vadd.f32 %v434, 1e-05
        %v451 = vadd.f32 %v435, 1e-05
        %v452 = vadd.f32 %v436, 1e-05
        %v453 = vadd.f32 %v437, 1e-05
        %v454 = vadd.f32 %v438, 1e-05
        %v455 = vadd.f32 %v439, 1e-05
        %v456 = vadd.f32 %v440, 1e-05
        %v457 = vadd.f32 %v441, 1e-05
        %v458 = vrsqrt.pop %v442
        %v459 = vrsqrt.pop %v443
        %v460 = vrsqrt.pop %v444
        %v461 = vrsqrt.pop %v445
        %v462 = vrsqrt.pop %v446
        %v463 = vrsqrt.pop %v447
        %v464 = vrsqrt.pop %v448
        %v465 = vrsqrt.pop %v449
        %v466 = vrsqrt.pop %v450
        %v467 = vrsqrt.pop %v451
        %v468 = vrsqrt.pop %v452
        %v469 = vrsqrt.pop %v453
        %v470 = vrsqrt.pop %v454
        %v471 = vrsqrt.pop %v455
        %v472 = vrsqrt.pop %v456
        %v473 = vrsqrt.pop %v457
        %v474 = vmul.f32 %v362, %v458
        %v475 = vmul.f32 %v363, %v459
        %v476 = vmul.f32 %v364, %v460
        %v477 = vmul.f32 %v365, %v461
        %v478 = vmul.f32 %v366, %v462
        %v479 = vmul.f32 %v367, %v463
        %v480 = vmul.f32 %v368, %v464
        %v481 = vmul.f32 %v369, %v465
        %v482 = vmul.f32 %v370, %v466
        %v483 = vmul.f32 %v371, %v467
        %v484 = vmul.f32 %v372, %v468
        %v485 = vmul.f32 %v373, %v469
        %v486 = vmul.f32 %v374, %v470
        %v487 = vmul.f32 %v375, %v471
        %v488 = vmul.f32 %v376, %v472
        %v489 = vmul.f32 %v377, %v473
        %v491 = vlaneseq
        %v492 = vshrl.u32 %v491, 7
        %v493 = vsub.s32 0, %v492
        %v494 = vrot.slane %v312, %v493
        %v496 = vmul.f32 %v474, %v494
        %v497 = vmul.f32 %v475, %v494
        %v498 = vmul.f32 %v476, %v494
        %v499 = vmul.f32 %v477, %v494
        %v500 = vmul.f32 %v478, %v494
        %v501 = vmul.f32 %v479, %v494
        %v502 = vmul.f32 %v480, %v494
        %v503 = vmul.f32 %v481, %v494
        %v504 = vmul.f32 %v482, %v494
        %v505 = vmul.f32 %v483, %v494
        %v506 = vmul.f32 %v484, %v494
        %v507 = vmul.f32 %v485, %v494
        %v508 = vmul.f32 %v486, %v494
        %v509 = vmul.f32 %v487, %v494
        %v510 = vmul.f32 %v488, %v494
        %v511 = vmul.f32 %v489, %v494
        %v513 = vlaneseq
        %v514 = vshrl.u32 %v513, 7
        %v515 = vsub.s32 0, %v514
        %v516 = vrot.slane %v313, %v515
        %v518 = vadd.f32 %v496, %v516
        %v519 = vadd.f32 %v497, %v516
        %v520 = vadd.f32 %v498, %v516
        %v521 = vadd.f32 %v499, %v516
        %v522 = vadd.f32 %v500, %v516
        %v523 = vadd.f32 %v501, %v516
        %v524 = vadd.f32 %v502, %v516
        %v525 = vadd.f32 %v503, %v516
        %v526 = vadd.f32 %v504, %v516
        %v527 = vadd.f32 %v505, %v516
        %v528 = vadd.f32 %v506, %v516
        %v529 = vadd.f32 %v507, %v516
        %v530 = vadd.f32 %v508, %v516
        %v531 = vadd.f32 %v509, %v516
        %v532 = vadd.f32 %v510, %v516
        %v533 = vadd.f32 %v511, %v516
        %v534 = vpack.c.bf16 %v519, %v518
        %v535 = vpack.c.bf16 %v521, %v520
        %v536 = vpack.c.bf16 %v523, %v522
        %v537 = vpack.c.bf16 %v525, %v524
        %v538 = vpack.c.bf16 %v527, %v526
        %v539 = vpack.c.bf16 %v529, %v528
        %v540 = vpack.c.bf16 %v531, %v530
        %v541 = vpack.c.bf16 %v533, %v532
        %v542 = vld [vmem:[#allocation5] sm:$0xf]
        %v543 = vld [vmem:[#allocation5 + $0x4] sm:$0xf]
        %v544 = vld [vmem:[#allocation5 + $0x8] sm:$0xf]
        %v545 = vld [vmem:[#allocation5 + $0xc] sm:$0xf]
        %v546 = vld [vmem:[#allocation5 + $0x10] sm:$0xf]
        %v547 = vld [vmem:[#allocation5 + $0x14] sm:$0xf]
        %v548 = vld [vmem:[#allocation5 + $0x18] sm:$0xf]
        %v549 = vld [vmem:[#allocation5 + $0x1c] sm:$0xf]
        %v550 = vld [vmem:[#allocation5 + $0x20] sm:$0xf]
        %v551 = vld [vmem:[#allocation5 + $0x24] sm:$0xf]
        %v552 = vld [vmem:[#allocation5 + $0x28] sm:$0xf]
        %v553 = vld [vmem:[#allocation5 + $0x2c] sm:$0xf]
        %v554 = vld [vmem:[#allocation5 + $0x30] sm:$0xf]
        %v555 = vld [vmem:[#allocation5 + $0x34] sm:$0xf]
        %v556 = vld [vmem:[#allocation5 + $0x38] sm:$0xf]
        %v557 = vld [vmem:[#allocation5 + $0x3c] sm:$0xf]
        %v558 = vld [vmem:[%s293] sm:$0x1]
        %v560 = vlaneseq
        %v561 = vshrl.u32 %v560, 7
        %v562 = vsub.s32 0, %v561
        %v563 = vrot.slane %v558, %v562
        %v581 = vunpack.c.l.b16 %v542
        %v582 = vunpack.c.l.b16 %v543
        %v583 = vunpack.c.l.b16 %v544
        %v584 = vunpack.c.l.b16 %v545
        %v585 = vunpack.c.l.b16 %v546
        %v586 = vunpack.c.l.b16 %v547
        %v587 = vunpack.c.l.b16 %v548
        %v588 = vunpack.c.l.b16 %v549
        %v589 = vunpack.c.l.b16 %v550
        %v590 = vunpack.c.l.b16 %v551
        %v591 = vunpack.c.l.b16 %v552
        %v592 = vunpack.c.l.b16 %v553
        %v593 = vunpack.c.l.b16 %v554
        %v594 = vunpack.c.l.b16 %v555
        %v595 = vunpack.c.l.b16 %v556
        %v596 = vunpack.c.l.b16 %v557
        %v597 = vpack.c.b16 %v582, %v581
        %v598 = vpack.c.b16 %v584, %v583
        %v599 = vpack.c.b16 %v586, %v585
        %v600 = vpack.c.b16 %v588, %v587
        %v601 = vpack.c.b16 %v590, %v589
        %v602 = vpack.c.b16 %v592, %v591
        %v603 = vpack.c.b16 %v594, %v593
        %v604 = vpack.c.b16 %v596, %v595
        %613 = vmatprep.subr.bf16.mxu0 0
        %614 = vmatpush1.bf16.msra.mxu0 %v604
        %615 = vmatprep.subr.bf16.mxu0 0
        %616 = vmatpush1.bf16.msra.mxu0 %v603
        %617 = vmatprep.subr.bf16.mxu0 0
        %618 = vmatpush1.bf16.msra.mxu0 %v602
        %619 = vmatprep.subr.bf16.mxu0 0
        %620 = vmatpush1.bf16.msra.mxu0 %v601
        %621 = vmatprep.subr.bf16.mxu0 0
        %622 = vmatpush1.bf16.msra.mxu0 %v600
        %623 = vmatprep.subr.bf16.mxu0 0
        %624 = vmatpush1.bf16.msra.mxu0 %v599
        %625 = vmatprep.subr.bf16.mxu0 0
        %626 = vmatpush1.bf16.msra.mxu0 %v598
        %627 = vmatprep.subr.bf16.mxu0 0
        %628 = vmatpush1.bf16.msra.mxu0 %v597
        %629 = vmatprep.subr.bf16.mxu0 0
        %630 = vmatpush2.bf16.msra.mxu0 0
        %631 = vmatprep.subr.bf16.mxu0 0
        %632 = vmatpush2.bf16.msra.mxu0 0
        %633 = vmatprep.subr.bf16.mxu0 0
        %634 = vmatpush2.bf16.msra.mxu0 0
        %635 = vmatprep.subr.bf16.mxu0 0
        %636 = vmatpush2.bf16.msra.mxu0 0
        %637 = vmatprep.subr.bf16.mxu0 0
        %638 = vmatpush2.bf16.msra.mxu0 0
        %639 = vmatprep.subr.bf16.mxu0 0
        %640 = vmatpush2.bf16.msra.mxu0 0
        %641 = vmatprep.subr.bf16.mxu0 0
        %642 = vmatpush2.bf16.msra.mxu0 0
        %643 = vmatprep.subr.bf16.mxu0 0
        %644 = vmatpush2.bf16.msra.mxu0 0
        %645 = vmatprep.mubr.bf16.mxu0 0
        %646 = vmatmul.mubr.bf16.gmra.mxu0 %v534
        %v647 = vpop.f32.mrf.mxu0
        %v648 = vadd.f32 %v563, %v647
        %v649 = vpop.f32.mrf.mxu0
        %v650 = vpop.f32.mrf.mxu0
        %v651 = vadd.f32 %v563, %v650
        %v652 = vpop.f32.mrf.mxu0
        %653 = vmatprep.mubr.bf16.mxu0 0
        %654 = vmatmul.mubr.bf16.gmra.mxu0 %v535
        %v655 = vpop.f32.mrf.mxu0
        %v656 = vadd.f32 %v563, %v655
        %v657 = vpop.f32.mrf.mxu0
        %v658 = vpop.f32.mrf.mxu0
        %v659 = vadd.f32 %v563, %v658
        %v660 = vpop.f32.mrf.mxu0
        %661 = vmatprep.mubr.bf16.mxu0 0
        %662 = vmatmul.mubr.bf16.gmra.mxu0 %v536
        %v663 = vpop.f32.mrf.mxu0
        %v664 = vadd.f32 %v563, %v663
        %v665 = vpop.f32.mrf.mxu0
        %v666 = vpop.f32.mrf.mxu0
        %v667 = vadd.f32 %v563, %v666
        %v668 = vpop.f32.mrf.mxu0
        %669 = vmatprep.mubr.bf16.mxu0 0
        %670 = vmatmul.mubr.bf16.gmra.mxu0 %v537
        %v671 = vpop.f32.mrf.mxu0
        %v672 = vadd.f32 %v563, %v671
        %v673 = vpop.f32.mrf.mxu0
        %v674 = vpop.f32.mrf.mxu0
        %v675 = vadd.f32 %v563, %v674
        %v676 = vpop.f32.mrf.mxu0
        %677 = vmatprep.mubr.bf16.mxu0 0
        %678 = vmatmul.mubr.bf16.gmra.mxu0 %v538
        %v679 = vpop.f32.mrf.mxu0
        %v680 = vadd.f32 %v563, %v679
        %v681 = vpop.f32.mrf.mxu0
        %v682 = vpop.f32.mrf.mxu0
        %v683 = vadd.f32 %v563, %v682
        %v684 = vpop.f32.mrf.mxu0
        %685 = vmatprep.mubr.bf16.mxu0 0
        %686 = vmatmul.mubr.bf16.gmra.mxu0 %v539
        %v687 = vpop.f32.mrf.mxu0
        %v688 = vadd.f32 %v563, %v687
        %v689 = vpop.f32.mrf.mxu0
        %v690 = vpop.f32.mrf.mxu0
        %v691 = vadd.f32 %v563, %v690
        %v692 = vpop.f32.mrf.mxu0
        %693 = vmatprep.mubr.bf16.mxu0 0
        %694 = vmatmul.mubr.bf16.gmra.mxu0 %v540
        %v695 = vpop.f32.mrf.mxu0
        %v696 = vadd.f32 %v563, %v695
        %v697 = vpop.f32.mrf.mxu0
        %v698 = vpop.f32.mrf.mxu0
        %v699 = vadd.f32 %v563, %v698
        %v700 = vpop.f32.mrf.mxu0
        %701 = vmatprep.mubr.bf16.mxu0 0
        %702 = vmatmul.mubr.bf16.gmra.mxu0 %v541
        %v703 = vpop.f32.mrf.mxu0
        %v704 = vadd.f32 %v563, %v703
        %v705 = vpop.f32.mrf.mxu0
        %v706 = vpop.f32.mrf.mxu0
        %v707 = vadd.f32 %v563, %v706
        %v708 = vpop.f32.mrf.mxu0
        %709 = vdwg.mxu0
        %710 = vst [vmem:[%s289] sm:$0xff] %v648
        %711 = vst [vmem:[%s289 + $0x8] sm:$0xff] %v651
        %712 = vst [vmem:[%s289 + $0x10] sm:$0xff] %v656
        %713 = vst [vmem:[%s289 + $0x18] sm:$0xff] %v659
        %714 = vst [vmem:[%s289 + $0x20] sm:$0xff] %v664
        %715 = vst [vmem:[%s289 + $0x28] sm:$0xff] %v667
        %716 = vst [vmem:[%s289 + $0x30] sm:$0xff] %v672
        %717 = vst [vmem:[%s289 + $0x38] sm:$0xff] %v675
        %718 = vst [vmem:[%s289 + $0x40] sm:$0xff] %v680
        %719 = vst [vmem:[%s289 + $0x48] sm:$0xff] %v683
        %720 = vst [vmem:[%s289 + $0x50] sm:$0xff] %v688
        %721 = vst [vmem:[%s289 + $0x58] sm:$0xff] %v691
        %722 = vst [vmem:[%s289 + $0x60] sm:$0xff] %v696
        %723 = vst [vmem:[%s289 + $0x68] sm:$0xff] %v699
        %724 = vst [vmem:[%s289 + $0x70] sm:$0xff] %v704
        %725 = vst [vmem:[%s289 + $0x78] sm:$0xff] %v707
        %s726 = sand.u32 %s165, 1
        %s727 = scalar_lea.sflag [#allocation4], %s726
        %s728 = sand.u32 %s165, 1
        %s729 = smul.addr %s728, 128
        %s730 = scalar_lea.vmem [#allocation7], %s729
        // Predicated region
        $region49: #{tpu_custom_call.1} parent=39 // pred_check
          %p731 = pneg %p175
        $region50: #{tpu_custom_call.1} parent=39 // pred_check_branch
          %733 = sbr.rel (%p731) target = $region52
        $region51: #{tpu_custom_call.1} parent=39 // pred_region
          %s734 = smul.u32 16, %s27
          %s736 = ssub.s32 2048, 2048
          %737 = vsyncadd %s727, %s736
          %s738 = sadd.s32 %s28, %s734
          %s739 = smul.addr %s738, 128
          %s740 = scalar_lea.hbm %s5, %s739
          %s741 = sshll.u32 %s730, 4
          %s742 = int_to_ptr.vmem [resolvable:$true] %s741
          %747 = dma.vmem_to_hbm [thread:$0]  %s742, 2048, %s740, %s727, 128, 128, 8
        $region52: #{tpu_custom_call.1} parent=39 // pred_fallthru
          _
      $region40: #{tpu_custom_call.1} parent=5 // pred_fallthru
        _
      %p748 = scmp.le.s32.totalorder 2, %s18
      // Predicated region
      $region53: #{tpu_custom_call.1} parent=5 // pred_check
        %p749 = pneg %p748
      $region54: #{tpu_custom_call.1} parent=5 // pred_check_branch
        %751 = sbr.rel (%p749) target = $region56
      $region55: #{tpu_custom_call.1} parent=5 // pred_region
        %s752 = ssub.s32 %s18, 2
        // Predicated region
        $region57: #{tpu_custom_call.1} parent=55 // pred_check
          %p753 = pneg %p181
        $region58: #{tpu_custom_call.1} parent=55 // pred_check_branch
          %755 = sbr.rel (%p753) target = $region60
        $region59: #{tpu_custom_call.1} parent=55 // pred_region
          %s756 = sand.u32 %s166, 1
          %s757 = scalar_lea.sflag [#allocation4], %s756
          %s758 = sand.u32 %s166, 1
          %s759 = smul.addr %s758, 128
          %s760 = scalar_lea.vmem [#allocation7], %s759
          %761 = dma.done %s757, 2048
        $region60: #{tpu_custom_call.1} parent=55 // pred_fallthru
          _
      $region56: #{tpu_custom_call.1} parent=5 // pred_fallthru
        _
    $region6: #{tpu_custom_call.1} parent=1 // loop_footer
      %s22 = sadd.s32 1, %s18
    $region7: #{tpu_custom_call.1} parent=1 // loop_footer_branch
      %17 = sbr.rel target = $region3
    $region8: #{tpu_custom_call.1} parent=1 // loop_exit
      _
    %762 = vsyncpa [#allocation3], 1
    %s763 = scalar_lea.sflag [#allocation3], 1
    %764 = vsyncpa %s763, 1
    %765 = vsyncpa [#allocation6], 1
    %766 = vsyncpa [#allocation4], 1
    %s767 = scalar_lea.sflag [#allocation4], 1
    %768 = vsyncpa %s767, 1

</llo_original>
